<compile_context>
chip_gen: v6e
topology: v6e:2x2x1
jax: 0.10.0
libtpu: 0.0.40
codegen_flags: <defaults>
</compile_context>

<pallas_src>
import functools

import jax
import jax.numpy as jnp
from jax import lax
from jax.experimental import pallas as pl
from jax.experimental.pallas import tpu as pltpu

DT = 0.01
THETA = 1.0
GAMMA = 0.9

_SUBLANE = 8
_LANE = 128
_MAX_T_CHUNK = 32   # timesteps per grid step
_MAX_UNROLL = 8     # inner-loop unroll cap (vreg pressure)


def _round_up(n, m):
    return ((n + m - 1) // m) * m


def _time_chunking(T, max_chunk=_MAX_T_CHUNK):
    """Chunk size that minimizes tail padding: cdiv(T, cdiv(T, max_chunk))."""
    n_chunks = -(-T // max_chunk)
    t_chunk = -(-T // n_chunks)
    return t_chunk, n_chunks, t_chunk * n_chunks


def _harmonic_rnn_kernel(
    # inputs
    x_ref,        # (1, t_chunk*B_tile, Ip)  bf16  chunk of inputs (pre-flattened)
    wxh_ref,      # (Ip, Hp)                 bf16
    wzh_ref,      # (Hp, Hp)                 bf16
    wo_ref,       # (Hp, Op)                 bf16
    om2_ref,      # (1, Hp)  f32  omega^2
    b2_ref,       # (1, Hp)  f32  2*|b_offset|
    alpha_ref,    # (1, Op)  f32  exp(-dt/|tau|)
    omalpha_ref,  # (1, Op)  f32  1 - alpha
    # outputs + scratch (unpacked below; layout depends on save_seq)
    *refs,
    t_chunk, t_total, unroll, save_seq, has_tail,
):
    if save_seq:
        (seq_ref, z_out_ref, u_out_ref, ou_out_ref, nspk_ref,
         xcur_sc, zchk_sc, oproj_sc,
         u_sc, v_sc, a_sc, z_sc, ou_sc, spk_sc) = refs
    else:
        (z_out_ref, u_out_ref, ou_out_ref, nspk_ref,
         xcur_sc, zchk_sc, oproj_sc,
         u_sc, v_sc, a_sc, z_sc, ou_sc, spk_sc) = refs
        seq_ref = None

    t = pl.program_id(1)          # time-chunk index (serial)
    b_tile, hp = u_sc.shape
    op = ou_sc.shape[1]
    f32 = jnp.float32

    @pl.when(t == 0)
    def _init():
        zh = jnp.zeros((b_tile, hp), f32)
        u_sc[...] = zh
        v_sc[...] = zh
        a_sc[...] = zh
        z_sc[...] = zh
        spk_sc[...] = zh
        ou_sc[...] = jnp.zeros((b_tile, op), f32)

    # ---- 1) whole-chunk input projection: one big MXU matmul ---------------
    xcur = jnp.dot(x_ref[0], wxh_ref[...], preferred_element_type=f32)
    xcur_sc[...] = xcur.reshape(t_chunk, b_tile, hp)

    # Hoisted sublane broadcasts (JAX does not CSE broadcast_in_dim in loops).
    om2 = jnp.broadcast_to(om2_ref[...], (b_tile, hp))
    b2 = jnp.broadcast_to(b2_ref[...], (b_tile, hp))

    # ---- 2) serial HRF recurrence; state in loop carry (vregs) -------------
    def step(i, carry):
        u, v, a, z, spk = carry
        cur = xcur_sc[i] + jnp.dot(z.astype(jnp.bfloat16), wzh_ref[...],
                                   preferred_element_type=f32)
        v_new = v + DT * (cur - b2 * v - om2 * u)
        u_new = u + DT * v_new
        z_raw = (u_new > (THETA + a)).astype(f32)
        a_new = GAMMA * a + z_raw
        if has_tail:
            # Padded tail timesteps: hold state, emit no spikes.
            valid = (t * t_chunk + i) < t_total
            u_new = jnp.where(valid, u_new, u)
            v_new = jnp.where(valid, v_new, v)
            a_new = jnp.where(valid, a_new, a)
            z_store = jnp.where(valid, z_raw, 0.0)
            z_new = jnp.where(valid, z_raw, z)
        else:
            z_store = z_raw
            z_new = z_raw
        zchk_sc[i] = z_store
        return (u_new, v_new, a_new, z_new, spk + z_store)

    carry0 = (u_sc[...], v_sc[...], a_sc[...], z_sc[...], spk_sc[...])
    u, v, a, z, spk = lax.fori_loop(0, t_chunk, step, carry0, unroll=unroll)
    u_sc[...] = u
    v_sc[...] = v
    a_sc[...] = a
    z_sc[...] = z
    spk_sc[...] = spk

    # ---- 3) batched LI readout: one matmul per chunk + VPU alpha recurrence -
    zc = zchk_sc[...].reshape(t_chunk * b_tile, hp).astype(jnp.bfloat16)
    oproj = jnp.dot(zc, wo_ref[...], preferred_element_type=f32)
    oproj_sc[...] = oproj.reshape(t_chunk, b_tile, op)

    alpha = jnp.broadcast_to(alpha_ref[...], (b_tile, op))
    one_m_alpha = jnp.broadcast_to(omalpha_ref[...], (b_tile, op))

    def out_step(i, ou):
        ou_new = alpha * ou + one_m_alpha * oproj_sc[i]
        if has_tail:
            valid = (t * t_chunk + i) < t_total
            ou_new = jnp.where(valid, ou_new, ou)
        if save_seq:
            seq_ref[i] = ou_new
        return ou_new

    ou = lax.fori_loop(0, t_chunk, out_step, ou_sc[...], unroll=unroll)
    ou_sc[...] = ou

    # ---- 4) final-state / spike-count writeback (last time chunk only) -----
    @pl.when(t == pl.num_programs(1) - 1)
    def _finalize():
        z_out_ref[...] = z
        u_out_ref[...] = u
        ou_out_ref[...] = ou
        nspk_ref[...] = jnp.broadcast_to(jnp.sum(spk), nspk_ref.shape)


@functools.partial(jax.jit, static_argnames=("label_last",))
def simple_harmonic_rnn(x, w_xh, w_zh, w_o, omega, b_offset, tau_mem,
                        label_last=False):
    """Pallas forward of SimpleHarmonicRNN.

    x: (T, B, I) float32.
    Returns: outputs (T, B, O) [or (1, B, O) if label_last],
             ((hidden_z, hidden_u), out_u), num_spikes (traced scalar).
    """
    T, B, I = x.shape
    H = w_zh.shape[0]
    O = w_o.shape[1]
    f32, bf16 = jnp.float32, jnp.bfloat16

    # Hardware-aligned padded sizes (zero padding is exact: padded hidden units
    # have omega=b=0 and zero weights, padded batch rows get zero input, so
    # neither ever spikes nor contributes to the readout or the spike count).
    Bp = _round_up(max(B, _SUBLANE), _SUBLANE)
    Ip = _round_up(I, _LANE)
    Hp = _round_up(H, _LANE)
    Op = _round_up(O, _LANE)

    # Batch tiling: two blocks when possible so the "parallel" batch axis can be
    # sharded across v7x's 2 TensorCores; degenerate single block otherwise.
    if Bp >= 2 * _SUBLANE and (Bp // 2) % _SUBLANE == 0:
        b_tile = Bp // 2
    else:
        b_tile = Bp
    nb = Bp // b_tile

    t_chunk, grid_t, T_pad = _time_chunking(T)
    has_tail = T_pad != T
    unroll = min(t_chunk, _MAX_UNROLL)
    save_seq = not label_last

    # ---- padded / bf16 operands --------------------------------------------
    x_p = jnp.zeros((T_pad, Bp, Ip), bf16).at[:T, :B, :I].set(x.astype(bf16))
    # (nb, T_pad*b_tile, Ip): rows for one (batch block, time chunk) form a
    # contiguous lane-dense 2-D slab -> no bf16 relayout inside the kernel.
    x_p = (x_p.reshape(T_pad, nb, b_tile, Ip)
               .transpose(1, 0, 2, 3)
               .reshape(nb, T_pad * b_tile, Ip))

    wxh_p = jnp.zeros((Ip, Hp), bf16).at[:I, :H].set(w_xh.astype(bf16))
    wzh_p = jnp.zeros((Hp, Hp), bf16).at[:H, :H].set(w_zh.astype(bf16))
    wo_p = jnp.zeros((Hp, Op), bf16).at[:H, :O].set(w_o.astype(bf16))

    om = jnp.abs(omega.astype(f32))
    om2 = jnp.zeros((1, Hp), f32).at[0, :H].set(om * om)
    b2 = jnp.zeros((1, Hp), f32).at[0, :H].set(2.0 * jnp.abs(b_offset.astype(f32)))
    alpha = jnp.exp(-DT / jnp.abs(tau_mem.astype(f32)))
    alpha_p = jnp.zeros((1, Op), f32).at[0, :O].set(alpha)
    omalpha_p = jnp.zeros((1, Op), f32).at[0, :O].set(1.0 - alpha)

    # ---- pallas_call plumbing -----------------------------------------------
    out_shapes = []
    out_specs = []
    if save_seq:
        out_shapes.append(jax.ShapeDtypeStruct((T_pad, Bp, Op), f32))
        out_specs.append(pl.BlockSpec((t_chunk, b_tile, Op),
                                      lambda b, t: (t, b, 0)))
    out_shapes += [
        jax.ShapeDtypeStruct((Bp, Hp), f32),                 # final hidden_z
        jax.ShapeDtypeStruct((Bp, Hp), f32),                 # final hidden_u
        jax.ShapeDtypeStruct((Bp, Op), f32),                 # final out_u
        jax.ShapeDtypeStruct((nb, _SUBLANE, _LANE), f32),    # spikes per batch blk
    ]
    out_specs += [
        pl.BlockSpec((b_tile, Hp), lambda b, t: (b, 0)),
        pl.BlockSpec((b_tile, Hp), lambda b, t: (b, 0)),
        pl.BlockSpec((b_tile, Op), lambda b, t: (b, 0)),
        pl.BlockSpec((1, _SUBLANE, _LANE), lambda b, t: (b, 0, 0)),
    ]

    in_specs = [
        pl.BlockSpec((1, t_chunk * b_tile, Ip), lambda b, t: (b, t, 0)),
        pl.BlockSpec((Ip, Hp), lambda b, t: (0, 0)),
        pl.BlockSpec((Hp, Hp), lambda b, t: (0, 0)),
        pl.BlockSpec((Hp, Op), lambda b, t: (0, 0)),
        pl.BlockSpec((1, Hp), lambda b, t: (0, 0)),
        pl.BlockSpec((1, Hp), lambda b, t: (0, 0)),
        pl.BlockSpec((1, Op), lambda b, t: (0, 0)),
        pl.BlockSpec((1, Op), lambda b, t: (0, 0)),
    ]

    scratch_shapes = [
        pltpu.VMEM((t_chunk, b_tile, Hp), f32),   # projected input currents
        pltpu.VMEM((t_chunk, b_tile, Hp), f32),   # spikes for batched readout
        pltpu.VMEM((t_chunk, b_tile, Op), f32),   # readout currents
        pltpu.VMEM((b_tile, Hp), f32),            # u
        pltpu.VMEM((b_tile, Hp), f32),            # v
        pltpu.VMEM((b_tile, Hp), f32),            # a
        pltpu.VMEM((b_tile, Hp), f32),            # z
        pltpu.VMEM((b_tile, Op), f32),            # out_u
        pltpu.VMEM((b_tile, Hp), f32),            # spike accumulator
    ]

    kernel = functools.partial(
        _harmonic_rnn_kernel, t_chunk=t_chunk, t_total=T, unroll=unroll,
        save_seq=save_seq, has_tail=has_tail)

    grid_spec = pltpu.PrefetchScalarGridSpec(
        num_scalar_prefetch=0,
        grid=(nb, grid_t),
        in_specs=in_specs,
        out_specs=out_specs,
        scratch_shapes=scratch_shapes,
    )

    results = pl.pallas_call(
        kernel,
        out_shape=tuple(out_shapes),
        grid_spec=grid_spec,
        compiler_params=pltpu.CompilerParams(
            dimension_semantics=("parallel", "arbitrary"),
            vmem_limit_bytes=64 * 1024 * 1024,
        ),
    )(x_p, wxh_p, wzh_p, wo_p, om2, b2, alpha_p, omalpha_p)

    if save_seq:
        seq, z_out, u_out, ou_out, nspk = results
        outputs = seq[:T, :B, :O]
    else:
        z_out, u_out, ou_out, nspk = results
        outputs = ou_out[None, :B, :O]

    num_spikes = jnp.sum(nspk[:, 0, 0])
    hidden = ((z_out[:B, :H], u_out[:B, :H]), ou_out[:B, :O])
    return outputs, hidden, num_spikes


@functools.partial(jax.jit, static_argnames=("label_last",))
def _reference(x, w_xh, w_zh, w_o, omega, b_offset, tau_mem, label_last=False):
    """Pure-JAX step-by-step reference (bf16 matmul operands, f32 state,
    mirroring the kernel's numerics)."""
    B = x.shape[1]
    H = w_zh.shape[0]
    O = w_o.shape[1]
    f32, bf16 = jnp.float32, jnp.bfloat16
    wxh = w_xh.astype(bf16)
    wzh = w_zh.astype(bf16)
    wo = w_o.astype(bf16)
    om2 = jnp.square(jnp.abs(omega.astype(f32)))
    b2 = 2.0 * jnp.abs(b_offset.astype(f32))
    alpha = jnp.exp(-DT / jnp.abs(tau_mem.astype(f32)))

    def step(carry, x_t):
        z, u, v, a, ou, ns = carry
        cur = (jnp.dot(x_t.astype(bf16), wxh, preferred_element_type=f32)
               + jnp.dot(z.astype(bf16), wzh, preferred_element_type=f32))
        v = v + DT * (cur - b2 * v - om2 * u)
        u = u + DT * v
        z = (u > (THETA + a)).astype(f32)
        a = GAMMA * a + z
        ns = ns + jnp.sum(z)
        cur_o = jnp.dot(z.astype(bf16), wo, preferred_element_type=f32)
        ou = alpha * ou + (1.0 - alpha) * cur_o
        return (z, u, v, a, ou, ns), ou

    zeros_h = jnp.zeros((B, H), f32)
    init = (zeros_h, zeros_h, zeros_h, zeros_h,
            jnp.zeros((B, O), f32), jnp.float32(0.0))
    (z, u, v, a, ou, ns), outs = lax.scan(step, init, x.astype(f32))
    if label_last:
        outs = outs[-1:]
    return outs, ((z, u), ou), ns


def init_params(key, input_size, hidden_size, output_size,
                adaptive_omega_a, adaptive_omega_b,
                adaptive_b_offset_a, adaptive_b_offset_b,
                out_adaptive_tau_mem_mean, out_adaptive_tau_mem_std):
    """Deterministic parameter construction mirroring the module's __init__ shapes."""
    k1, k2, k3, k4, k5, k6 = jax.random.split(key, 6)
    fan_in_h = input_size + hidden_size
    bound_h = 1.0 / jnp.sqrt(fan_in_h)
    bound_o = 1.0 / jnp.sqrt(hidden_size)
    w_xh = jax.random.uniform(k1, (input_size, hidden_size), jnp.float32,
                              -bound_h, bound_h)
    w_zh = jax.random.uniform(k2, (hidden_size, hidden_size), jnp.float32,
                              -bound_h, bound_h)
    w_o = jax.random.uniform(k3, (hidden_size, output_size), jnp.float32,
                             -bound_o, bound_o)
    omega = jax.random.uniform(k4, (hidden_size,), jnp.float32,
                               adaptive_omega_a, adaptive_omega_b)
    b_offset = jax.random.uniform(k5, (hidden_size,), jnp.float32,
                                  adaptive_b_offset_a, adaptive_b_offset_b)
    tau_mem = (out_adaptive_tau_mem_mean
               + out_adaptive_tau_mem_std
               * jax.random.normal(k6, (output_size,), jnp.float32))
    return w_xh, w_zh, w_o, omega, b_offset, tau_mem


if __name__ == "__main__":
    import numpy as np

    key = jax.random.PRNGKey(0)
    kx1, kp1, kx2, kp2 = jax.random.split(key, 4)

    # ---- Test 1: small shapes, T fits one chunk, full sequence output ------
    T, B, I, H, O = 8, 2, 16, 32, 4
    x = 100.0 * jax.random.normal(kx1, (T, B, I), jnp.float32)
    params = init_params(kp1, I, H, O,
                         adaptive_omega_a=3.0, adaptive_omega_b=6.0,
                         adaptive_b_offset_a=0.1, adaptive_b_offset_b=1.0,
                         out_adaptive_tau_mem_mean=20.0,
                         out_adaptive_tau_mem_std=5.0)

    outs, ((hz, hu), ou), ns = simple_harmonic_rnn(x, *params, label_last=False)
    jax.block_until_ready((outs, hz, hu, ou, ns))
    r_outs, ((r_hz, r_hu), r_ou), r_ns = _reference(x, *params, label_last=False)

    assert outs.shape == (T, B, O)
    assert hz.shape == (B, H) and hu.shape == (B, H) and ou.shape == (B, O)
    assert jnp.isfinite(outs).all() and jnp.isfinite(ns)
    np.testing.assert_allclose(np.asarray(outs), np.asarray(r_outs),
                               rtol=5e-3, atol=1e-3)
    np.testing.assert_allclose(np.asarray(hu), np.asarray(r_hu),
                               rtol=5e-3, atol=5e-3)
    np.testing.assert_allclose(np.asarray(ou), np.asarray(r_ou),
                               rtol=5e-3, atol=1e-3)
    assert abs(float(ns) - float(r_ns)) <= 5.0

    # ---- Test 2: T=35 (padded tail), B=16 (two batch blocks), label_last ---
    T2, B2 = 35, 16
    x2 = 100.0 * jax.random.normal(kx2, (T2, B2, I), jnp.float32)
    params2 = init_params(kp2, I, H, O, 3.0, 6.0, 0.1, 1.0, 20.0, 5.0)

    outs2, ((hz2, hu2), ou2), ns2 = simple_harmonic_rnn(x2, *params2,
                                                        label_last=True)
    jax.block_until_ready((outs2, hz2, hu2, ou2, ns2))
    r_outs2, ((r_hz2, r_hu2), r_ou2), r_ns2 = _reference(x2, *params2,
                                                         label_last=True)

    assert outs2.shape == (1, B2, O)
    np.testing.assert_allclose(np.asarray(outs2), np.asarray(r_outs2),
                               rtol=5e-3, atol=1e-3)
    np.testing.assert_allclose(np.asarray(hu2), np.asarray(r_hu2),
                               rtol=5e-3, atol=5e-3)
    np.testing.assert_allclose(np.asarray(ou2), np.asarray(r_ou2),
                               rtol=5e-3, atol=1e-3)
    assert abs(float(ns2) - float(r_ns2)) <= 5.0

    print("KERNEL_OK")
</pallas_src>

<mosaic_0001>
module attributes {stable_mosaic.version = 11 : i64} {
  func.func @_harmonic_rnn_kernel(%arg0: i32, %arg1: i32, %arg2: memref<1x64x128xbf16, #tpu.memory_space<vmem>>, %arg3: memref<128x128xbf16, #tpu.memory_space<vmem>>, %arg4: memref<128x128xbf16, #tpu.memory_space<vmem>>, %arg5: memref<128x128xbf16, #tpu.memory_space<vmem>>, %arg6: memref<1x128xf32, #tpu.memory_space<vmem>>, %arg7: memref<1x128xf32, #tpu.memory_space<vmem>>, %arg8: memref<1x128xf32, #tpu.memory_space<vmem>>, %arg9: memref<1x128xf32, #tpu.memory_space<vmem>>, %arg10: memref<8x8x128xf32, #tpu.memory_space<vmem>>, %arg11: memref<8x128xf32, #tpu.memory_space<vmem>>, %arg12: memref<8x128xf32, #tpu.memory_space<vmem>>, %arg13: memref<8x128xf32, #tpu.memory_space<vmem>>, %arg14: memref<1x8x128xf32, #tpu.memory_space<vmem>>, %arg15: memref<8x8x128xf32, #tpu.memory_space<vmem>>, %arg16: memref<8x8x128xf32, #tpu.memory_space<vmem>>, %arg17: memref<8x8x128xf32, #tpu.memory_space<vmem>>, %arg18: memref<8x128xf32, #tpu.memory_space<vmem>>, %arg19: memref<8x128xf32, #tpu.memory_space<vmem>>, %arg20: memref<8x128xf32, #tpu.memory_space<vmem>>, %arg21: memref<8x128xf32, #tpu.memory_space<vmem>>, %arg22: memref<8x128xf32, #tpu.memory_space<vmem>>, %arg23: memref<8x128xf32, #tpu.memory_space<vmem>>) attributes {dimension_semantics = [#tpu.dimension_semantics<parallel>, #tpu.dimension_semantics<arbitrary>], iteration_bounds = array<i64: 1, 1>, scalar_prefetch = 0 : i64, scratch_operands = 9 : i64, tpu.core_type = #tpu.core_type<tc>, window_params = [{transform_indices = @transform_0, window_bounds = array<i64: 1, 64, 128>}, {pipeline_mode = #tpu.pipeline_mode<synchronous>, transform_indices = @transform_1, window_bounds = array<i64: 128, 128>}, {pipeline_mode = #tpu.pipeline_mode<synchronous>, transform_indices = @transform_2, window_bounds = array<i64: 128, 128>}, {pipeline_mode = #tpu.pipeline_mode<synchronous>, transform_indices = @transform_3, window_bounds = array<i64: 128, 128>}, {pipeline_mode = #tpu.pipeline_mode<synchronous>, transform_indices = @transform_4, window_bounds = array<i64: 1, 128>}, {pipeline_mode = #tpu.pipeline_mode<synchronous>, transform_indices = @transform_5, window_bounds = array<i64: 1, 128>}, {pipeline_mode = #tpu.pipeline_mode<synchronous>, transform_indices = @transform_6, window_bounds = array<i64: 1, 128>}, {pipeline_mode = #tpu.pipeline_mode<synchronous>, transform_indices = @transform_7, window_bounds = array<i64: 1, 128>}, {transform_indices = @transform_8, window_bounds = array<i64: 8, 8, 128>}, {transform_indices = @transform_9, window_bounds = array<i64: 8, 128>}, {transform_indices = @transform_10, window_bounds = array<i64: 8, 128>}, {transform_indices = @transform_11, window_bounds = array<i64: 8, 128>}, {transform_indices = @transform_12, window_bounds = array<i64: 1, 8, 128>}]} {
    %c0_i32 = arith.constant 0 : i32
    %0 = arith.cmpi eq, %arg1, %c0_i32 : i32
    %1 = arith.extui %0 : i1 to i32
    %c0_i32_0 = arith.constant 0 : i32
    %2 = arith.cmpi ne, %1, %c0_i32_0 : i32
    scf.if %2 {
      %cst_181 = arith.constant 0.000000e+00 : f32
      %363 = vector.broadcast %cst_181 : f32 to vector<8x128xf32>
      %c0_182 = arith.constant 0 : index
      %c0_183 = arith.constant 0 : index
      %364 = vector.load %arg18[%c0_182, %c0_183] : memref<8x128xf32, #tpu.memory_space<vmem>>, vector<8x128xf32>
      tpu.vector_store %arg18[%c0_182, %c0_183], %363 {strides = array<i32>} : memref<8x128xf32, #tpu.memory_space<vmem>>, vector<8x128xf32>,
      %c0_184 = arith.constant 0 : index
      %c0_185 = arith.constant 0 : index
      %365 = vector.load %arg19[%c0_184, %c0_185] : memref<8x128xf32, #tpu.memory_space<vmem>>, vector<8x128xf32>
      tpu.vector_store %arg19[%c0_184, %c0_185], %363 {strides = array<i32>} : memref<8x128xf32, #tpu.memory_space<vmem>>, vector<8x128xf32>,
      %c0_186 = arith.constant 0 : index
      %c0_187 = arith.constant 0 : index
      %366 = vector.load %arg20[%c0_186, %c0_187] : memref<8x128xf32, #tpu.memory_space<vmem>>, vector<8x128xf32>
      tpu.vector_store %arg20[%c0_186, %c0_187], %363 {strides = array<i32>} : memref<8x128xf32, #tpu.memory_space<vmem>>, vector<8x128xf32>,
      %c0_188 = arith.constant 0 : index
      %c0_189 = arith.constant 0 : index
      %367 = vector.load %arg21[%c0_188, %c0_189] : memref<8x128xf32, #tpu.memory_space<vmem>>, vector<8x128xf32>
      tpu.vector_store %arg21[%c0_188, %c0_189], %363 {strides = array<i32>} : memref<8x128xf32, #tpu.memory_space<vmem>>, vector<8x128xf32>,
      %c0_190 = arith.constant 0 : index
      %c0_191 = arith.constant 0 : index
      %368 = vector.load %arg23[%c0_190, %c0_191] : memref<8x128xf32, #tpu.memory_space<vmem>>, vector<8x128xf32>
      tpu.vector_store %arg23[%c0_190, %c0_191], %363 {strides = array<i32>} : memref<8x128xf32, #tpu.memory_space<vmem>>, vector<8x128xf32>,
      %cst_192 = arith.constant 0.000000e+00 : f32
      %369 = vector.broadcast %cst_192 : f32 to vector<8x128xf32>
      %c0_193 = arith.constant 0 : index
      %c0_194 = arith.constant 0 : index
      %370 = vector.load %arg22[%c0_193, %c0_194] : memref<8x128xf32, #tpu.memory_space<vmem>>, vector<8x128xf32>
      tpu.vector_store %arg22[%c0_193, %c0_194], %369 {strides = array<i32>} : memref<8x128xf32, #tpu.memory_space<vmem>>, vector<8x128xf32>,
    } else {
    }
    %c0 = arith.constant 0 : index
    %c0_1 = arith.constant 0 : index
    %c0_2 = arith.constant 0 : index
    %3 = vector.load %arg2[%c0, %c0_1, %c0_2] : memref<1x64x128xbf16, #tpu.memory_space<vmem>>, vector<1x64x128xbf16>
    %4 = vector.shape_cast %3 : vector<1x64x128xbf16> to vector<64x128xbf16>
    %c0_3 = arith.constant 0 : index
    %c0_4 = arith.constant 0 : index
    %5 = vector.load %arg3[%c0_3, %c0_4] : memref<128x128xbf16, #tpu.memory_space<vmem>>, vector<128x128xbf16>
    %cst = arith.constant dense<0.000000e+00> : vector<64x128xf32>
    %6 = tpu.matmul %4, %5, %cst {dimension_numbers = #tpu.dot_dimension_numbers<[1], [0], [0], [1], [0, 0, 1, 1], [], []>} : vector<64x128xbf16>, vector<128x128xbf16>, vector<64x128xf32> -> vector<64x128xf32>
    %7 = vector.shape_cast %6 : vector<64x128xf32> to vector<8x8x128xf32>
    %c0_5 = arith.constant 0 : index
    %c0_6 = arith.constant 0 : index
    %c0_7 = arith.constant 0 : index
    %8 = vector.load %arg15[%c0_5, %c0_6, %c0_7] : memref<8x8x128xf32, #tpu.memory_space<vmem>>, vector<8x8x128xf32>
    tpu.vector_store %arg15[%c0_5, %c0_6, %c0_7], %7 {strides = array<i32>} : memref<8x8x128xf32, #tpu.memory_space<vmem>>, vector<8x8x128xf32>,
    %c0_8 = arith.constant 0 : index
    %c0_9 = arith.constant 0 : index
    %9 = vector.load %arg6[%c0_8, %c0_9] : memref<1x128xf32, #tpu.memory_space<vmem>>, vector<1x128xf32>
    %10 = vector.shape_cast %9 : vector<1x128xf32> to vector<1x128xf32>
    %11 = vector.broadcast %10 : vector<1x128xf32> to vector<8x128xf32>
    %c0_10 = arith.constant 0 : index
    %c0_11 = arith.constant 0 : index
    %12 = vector.load %arg7[%c0_10, %c0_11] : memref<1x128xf32, #tpu.memory_space<vmem>>, vector<1x128xf32>
    %13 = vector.shape_cast %12 : vector<1x128xf32> to vector<1x128xf32>
    %14 = vector.broadcast %13 : vector<1x128xf32> to vector<8x128xf32>
    %c0_12 = arith.constant 0 : index
    %c0_13 = arith.constant 0 : index
    %15 = vector.load %arg18[%c0_12, %c0_13] : memref<8x128xf32, #tpu.memory_space<vmem>>, vector<8x128xf32>
    %c0_14 = arith.constant 0 : index
    %c0_15 = arith.constant 0 : index
    %16 = vector.load %arg19[%c0_14, %c0_15] : memref<8x128xf32, #tpu.memory_space<vmem>>, vector<8x128xf32>
    %c0_16 = arith.constant 0 : index
    %c0_17 = arith.constant 0 : index
    %17 = vector.load %arg20[%c0_16, %c0_17] : memref<8x128xf32, #tpu.memory_space<vmem>>, vector<8x128xf32>
    %c0_18 = arith.constant 0 : index
    %c0_19 = arith.constant 0 : index
    %18 = vector.load %arg21[%c0_18, %c0_19] : memref<8x128xf32, #tpu.memory_space<vmem>>, vector<8x128xf32>
    %c0_20 = arith.constant 0 : index
    %c0_21 = arith.constant 0 : index
    %19 = vector.load %arg23[%c0_20, %c0_21] : memref<8x128xf32, #tpu.memory_space<vmem>>, vector<8x128xf32>
    %c0_i32_22 = arith.constant 0 : i32
    %20 = arith.index_cast %c0_i32_22 : i32 to index
    %c0_23 = arith.constant 0 : index
    %c0_24 = arith.constant 0 : index
    %21 = vector.load %arg15[%20, %c0_23, %c0_24] : memref<8x8x128xf32, #tpu.memory_space<vmem>>, vector<1x8x128xf32>
    %22 = vector.shape_cast %21 : vector<1x8x128xf32> to vector<8x128xf32>
    %23 = arith.truncf %18 : vector<8x128xf32> to vector<8x128xbf16>
    %c0_25 = arith.constant 0 : index
    %c0_26 = arith.constant 0 : index
    %24 = vector.load %arg4[%c0_25, %c0_26] : memref<128x128xbf16, #tpu.memory_space<vmem>>, vector<128x128xbf16>
    %cst_27 = arith.constant dense<0.000000e+00> : vector<8x128xf32>
    %25 = tpu.matmul %23, %24, %cst_27 {dimension_numbers = #tpu.dot_dimension_numbers<[1], [0], [0], [1], [0, 0, 1, 1], [], []>} : vector<8x128xbf16>, vector<128x128xbf16>, vector<8x128xf32> -> vector<8x128xf32>
    %26 = arith.addf %22, %25 : vector<8x128xf32>
    %27 = arith.mulf %14, %16 : vector<8x128xf32>
    %28 = arith.subf %26, %27 : vector<8x128xf32>
    %29 = arith.mulf %11, %15 : vector<8x128xf32>
    %30 = arith.subf %28, %29 : vector<8x128xf32>
    %cst_28 = arith.constant 0.00999999977 : f32
    %31 = vector.broadcast %cst_28 : f32 to vector<8x128xf32>
    %32 = arith.mulf %31, %30 : vector<8x128xf32>
    %33 = arith.addf %16, %32 : vector<8x128xf32>
    %cst_29 = arith.constant 0.00999999977 : f32
    %34 = vector.broadcast %cst_29 : f32 to vector<8x128xf32>
    %35 = arith.mulf %34, %33 : vector<8x128xf32>
    %36 = arith.addf %15, %35 : vector<8x128xf32>
    %cst_30 = arith.constant 1.000000e+00 : f32
    %37 = vector.broadcast %cst_30 : f32 to vector<8x128xf32>
    %38 = arith.addf %37, %17 : vector<8x128xf32>
    %39 = arith.cmpf ogt, %36, %38 : vector<8x128xf32>
    %40 = arith.extui %39 : vector<8x128xi1> to vector<8x128xi32>
    %41 = arith.sitofp %40 : vector<8x128xi32> to vector<8x128xf32>
    %cst_31 = arith.constant 0.899999976 : f32
    %42 = vector.broadcast %cst_31 : f32 to vector<8x128xf32>
    %43 = arith.mulf %42, %17 : vector<8x128xf32>
    %44 = arith.addf %43, %41 : vector<8x128xf32>
    %45 = arith.index_cast %c0_i32_22 : i32 to index
    %c0_32 = arith.constant 0 : index
    %c0_33 = arith.constant 0 : index
    %46 = vector.load %arg16[%45, %c0_32, %c0_33] : memref<8x8x128xf32, #tpu.memory_space<vmem>>, vector<1x8x128xf32>
    %47 = vector.shape_cast %46 : vector<1x8x128xf32> to vector<8x128xf32>
    %48 = vector.shape_cast %41 : vector<8x128xf32> to vector<1x8x128xf32>
    tpu.vector_store %arg16[%45, %c0_32, %c0_33], %48 {strides = array<i32>} : memref<8x8x128xf32, #tpu.memory_space<vmem>>, vector<1x8x128xf32>,
    %49 = arith.addf %19, %41 : vector<8x128xf32>
    %c1_i32 = arith.constant 1 : i32
    %50 = arith.index_cast %c1_i32 : i32 to index
    %c0_34 = arith.constant 0 : index
    %c0_35 = arith.constant 0 : index
    %51 = vector.load %arg15[%50, %c0_34, %c0_35] : memref<8x8x128xf32, #tpu.memory_space<vmem>>, vector<1x8x128xf32>
    %52 = vector.shape_cast %51 : vector<1x8x128xf32> to vector<8x128xf32>
    %53 = arith.truncf %41 : vector<8x128xf32> to vector<8x128xbf16>
    %c0_36 = arith.constant 0 : index
    %c0_37 = arith.constant 0 : index
    %54 = vector.load %arg4[%c0_36, %c0_37] : memref<128x128xbf16, #tpu.memory_space<vmem>>, vector<128x128xbf16>
    %cst_38 = arith.constant dense<0.000000e+00> : vector<8x128xf32>
    %55 = tpu.matmul %53, %54, %cst_38 {dimension_numbers = #tpu.dot_dimension_numbers<[1], [0], [0], [1], [0, 0, 1, 1], [], []>} : vector<8x128xbf16>, vector<128x128xbf16>, vector<8x128xf32> -> vector<8x128xf32>
    %56 = arith.addf %52, %55 : vector<8x128xf32>
    %57 = arith.mulf %14, %33 : vector<8x128xf32>
    %58 = arith.subf %56, %57 : vector<8x128xf32>
    %59 = arith.mulf %11, %36 : vector<8x128xf32>
    %60 = arith.subf %58, %59 : vector<8x128xf32>
    %cst_39 = arith.constant 0.00999999977 : f32
    %61 = vector.broadcast %cst_39 : f32 to vector<8x128xf32>
    %62 = arith.mulf %61, %60 : vector<8x128xf32>
    %63 = arith.addf %33, %62 : vector<8x128xf32>
    %cst_40 = arith.constant 0.00999999977 : f32
    %64 = vector.broadcast %cst_40 : f32 to vector<8x128xf32>
    %65 = arith.mulf %64, %63 : vector<8x128xf32>
    %66 = arith.addf %36, %65 : vector<8x128xf32>
    %cst_41 = arith.constant 1.000000e+00 : f32
    %67 = vector.broadcast %cst_41 : f32 to vector<8x128xf32>
    %68 = arith.addf %67, %44 : vector<8x128xf32>
    %69 = arith.cmpf ogt, %66, %68 : vector<8x128xf32>
    %70 = arith.extui %69 : vector<8x128xi1> to vector<8x128xi32>
    %71 = arith.sitofp %70 : vector<8x128xi32> to vector<8x128xf32>
    %cst_42 = arith.constant 0.899999976 : f32
    %72 = vector.broadcast %cst_42 : f32 to vector<8x128xf32>
    %73 = arith.mulf %72, %44 : vector<8x128xf32>
    %74 = arith.addf %73, %71 : vector<8x128xf32>
    %75 = arith.index_cast %c1_i32 : i32 to index
    %c0_43 = arith.constant 0 : index
    %c0_44 = arith.constant 0 : index
    %76 = vector.load %arg16[%75, %c0_43, %c0_44] : memref<8x8x128xf32, #tpu.memory_space<vmem>>, vector<1x8x128xf32>
    %77 = vector.shape_cast %76 : vector<1x8x128xf32> to vector<8x128xf32>
    %78 = vector.shape_cast %71 : vector<8x128xf32> to vector<1x8x128xf32>
    tpu.vector_store %arg16[%75, %c0_43, %c0_44], %78 {strides = array<i32>} : memref<8x8x128xf32, #tpu.memory_space<vmem>>, vector<1x8x128xf32>,
    %79 = arith.addf %49, %71 : vector<8x128xf32>
    %c2_i32 = arith.constant 2 : i32
    %80 = arith.index_cast %c2_i32 : i32 to index
    %c0_45 = arith.constant 0 : index
    %c0_46 = arith.constant 0 : index
    %81 = vector.load %arg15[%80, %c0_45, %c0_46] : memref<8x8x128xf32, #tpu.memory_space<vmem>>, vector<1x8x128xf32>
    %82 = vector.shape_cast %81 : vector<1x8x128xf32> to vector<8x128xf32>
    %83 = arith.truncf %71 : vector<8x128xf32> to vector<8x128xbf16>
    %c0_47 = arith.constant 0 : index
    %c0_48 = arith.constant 0 : index
    %84 = vector.load %arg4[%c0_47, %c0_48] : memref<128x128xbf16, #tpu.memory_space<vmem>>, vector<128x128xbf16>
    %cst_49 = arith.constant dense<0.000000e+00> : vector<8x128xf32>
    %85 = tpu.matmul %83, %84, %cst_49 {dimension_numbers = #tpu.dot_dimension_numbers<[1], [0], [0], [1], [0, 0, 1, 1], [], []>} : vector<8x128xbf16>, vector<128x128xbf16>, vector<8x128xf32> -> vector<8x128xf32>
    %86 = arith.addf %82, %85 : vector<8x128xf32>
    %87 = arith.mulf %14, %63 : vector<8x128xf32>
    %88 = arith.subf %86, %87 : vector<8x128xf32>
    %89 = arith.mulf %11, %66 : vector<8x128xf32>
    %90 = arith.subf %88, %89 : vector<8x128xf32>
    %cst_50 = arith.constant 0.00999999977 : f32
    %91 = vector.broadcast %cst_50 : f32 to vector<8x128xf32>
    %92 = arith.mulf %91, %90 : vector<8x128xf32>
    %93 = arith.addf %63, %92 : vector<8x128xf32>
    %cst_51 = arith.constant 0.00999999977 : f32
    %94 = vector.broadcast %cst_51 : f32 to vector<8x128xf32>
    %95 = arith.mulf %94, %93 : vector<8x128xf32>
    %96 = arith.addf %66, %95 : vector<8x128xf32>
    %cst_52 = arith.constant 1.000000e+00 : f32
    %97 = vector.broadcast %cst_52 : f32 to vector<8x128xf32>
    %98 = arith.addf %97, %74 : vector<8x128xf32>
    %99 = arith.cmpf ogt, %96, %98 : vector<8x128xf32>
    %100 = arith.extui %99 : vector<8x128xi1> to vector<8x128xi32>
    %101 = arith.sitofp %100 : vector<8x128xi32> to vector<8x128xf32>
    %cst_53 = arith.constant 0.899999976 : f32
    %102 = vector.broadcast %cst_53 : f32 to vector<8x128xf32>
    %103 = arith.mulf %102, %74 : vector<8x128xf32>
    %104 = arith.addf %103, %101 : vector<8x128xf32>
    %105 = arith.index_cast %c2_i32 : i32 to index
    %c0_54 = arith.constant 0 : index
    %c0_55 = arith.constant 0 : index
    %106 = vector.load %arg16[%105, %c0_54, %c0_55] : memref<8x8x128xf32, #tpu.memory_space<vmem>>, vector<1x8x128xf32>
    %107 = vector.shape_cast %106 : vector<1x8x128xf32> to vector<8x128xf32>
    %108 = vector.shape_cast %101 : vector<8x128xf32> to vector<1x8x128xf32>
    tpu.vector_store %arg16[%105, %c0_54, %c0_55], %108 {strides = array<i32>} : memref<8x8x128xf32, #tpu.memory_space<vmem>>, vector<1x8x128xf32>,
    %109 = arith.addf %79, %101 : vector<8x128xf32>
    %c3_i32 = arith.constant 3 : i32
    %110 = arith.index_cast %c3_i32 : i32 to index
    %c0_56 = arith.constant 0 : index
    %c0_57 = arith.constant 0 : index
    %111 = vector.load %arg15[%110, %c0_56, %c0_57] : memref<8x8x128xf32, #tpu.memory_space<vmem>>, vector<1x8x128xf32>
    %112 = vector.shape_cast %111 : vector<1x8x128xf32> to vector<8x128xf32>
    %113 = arith.truncf %101 : vector<8x128xf32> to vector<8x128xbf16>
    %c0_58 = arith.constant 0 : index
    %c0_59 = arith.constant 0 : index
    %114 = vector.load %arg4[%c0_58, %c0_59] : memref<128x128xbf16, #tpu.memory_space<vmem>>, vector<128x128xbf16>
    %cst_60 = arith.constant dense<0.000000e+00> : vector<8x128xf32>
    %115 = tpu.matmul %113, %114, %cst_60 {dimension_numbers = #tpu.dot_dimension_numbers<[1], [0], [0], [1], [0, 0, 1, 1], [], []>} : vector<8x128xbf16>, vector<128x128xbf16>, vector<8x128xf32> -> vector<8x128xf32>
    %116 = arith.addf %112, %115 : vector<8x128xf32>
    %117 = arith.mulf %14, %93 : vector<8x128xf32>
    %118 = arith.subf %116, %117 : vector<8x128xf32>
    %119 = arith.mulf %11, %96 : vector<8x128xf32>
    %120 = arith.subf %118, %119 : vector<8x128xf32>
    %cst_61 = arith.constant 0.00999999977 : f32
    %121 = vector.broadcast %cst_61 : f32 to vector<8x128xf32>
    %122 = arith.mulf %121, %120 : vector<8x128xf32>
    %123 = arith.addf %93, %122 : vector<8x128xf32>
    %cst_62 = arith.constant 0.00999999977 : f32
    %124 = vector.broadcast %cst_62 : f32 to vector<8x128xf32>
    %125 = arith.mulf %124, %123 : vector<8x128xf32>
    %126 = arith.addf %96, %125 : vector<8x128xf32>
    %cst_63 = arith.constant 1.000000e+00 : f32
    %127 = vector.broadcast %cst_63 : f32 to vector<8x128xf32>
    %128 = arith.addf %127, %104 : vector<8x128xf32>
    %129 = arith.cmpf ogt, %126, %128 : vector<8x128xf32>
    %130 = arith.extui %129 : vector<8x128xi1> to vector<8x128xi32>
    %131 = arith.sitofp %130 : vector<8x128xi32> to vector<8x128xf32>
    %cst_64 = arith.constant 0.899999976 : f32
    %132 = vector.broadcast %cst_64 : f32 to vector<8x128xf32>
    %133 = arith.mulf %132, %104 : vector<8x128xf32>
    %134 = arith.addf %133, %131 : vector<8x128xf32>
    %135 = arith.index_cast %c3_i32 : i32 to index
    %c0_65 = arith.constant 0 : index
    %c0_66 = arith.constant 0 : index
    %136 = vector.load %arg16[%135, %c0_65, %c0_66] : memref<8x8x128xf32, #tpu.memory_space<vmem>>, vector<1x8x128xf32>
    %137 = vector.shape_cast %136 : vector<1x8x128xf32> to vector<8x128xf32>
    %138 = vector.shape_cast %131 : vector<8x128xf32> to vector<1x8x128xf32>
    tpu.vector_store %arg16[%135, %c0_65, %c0_66], %138 {strides = array<i32>} : memref<8x8x128xf32, #tpu.memory_space<vmem>>, vector<1x8x128xf32>,
    %139 = arith.addf %109, %131 : vector<8x128xf32>
    %c4_i32 = arith.constant 4 : i32
    %140 = arith.index_cast %c4_i32 : i32 to index
    %c0_67 = arith.constant 0 : index
    %c0_68 = arith.constant 0 : index
    %141 = vector.load %arg15[%140, %c0_67, %c0_68] : memref<8x8x128xf32, #tpu.memory_space<vmem>>, vector<1x8x128xf32>
    %142 = vector.shape_cast %141 : vector<1x8x128xf32> to vector<8x128xf32>
    %143 = arith.truncf %131 : vector<8x128xf32> to vector<8x128xbf16>
    %c0_69 = arith.constant 0 : index
    %c0_70 = arith.constant 0 : index
    %144 = vector.load %arg4[%c0_69, %c0_70] : memref<128x128xbf16, #tpu.memory_space<vmem>>, vector<128x128xbf16>
    %cst_71 = arith.constant dense<0.000000e+00> : vector<8x128xf32>
    %145 = tpu.matmul %143, %144, %cst_71 {dimension_numbers = #tpu.dot_dimension_numbers<[1], [0], [0], [1], [0, 0, 1, 1], [], []>} : vector<8x128xbf16>, vector<128x128xbf16>, vector<8x128xf32> -> vector<8x128xf32>
    %146 = arith.addf %142, %145 : vector<8x128xf32>
    %147 = arith.mulf %14, %123 : vector<8x128xf32>
    %148 = arith.subf %146, %147 : vector<8x128xf32>
    %149 = arith.mulf %11, %126 : vector<8x128xf32>
    %150 = arith.subf %148, %149 : vector<8x128xf32>
    %cst_72 = arith.constant 0.00999999977 : f32
    %151 = vector.broadcast %cst_72 : f32 to vector<8x128xf32>
    %152 = arith.mulf %151, %150 : vector<8x128xf32>
    %153 = arith.addf %123, %152 : vector<8x128xf32>
    %cst_73 = arith.constant 0.00999999977 : f32
    %154 = vector.broadcast %cst_73 : f32 to vector<8x128xf32>
    %155 = arith.mulf %154, %153 : vector<8x128xf32>
    %156 = arith.addf %126, %155 : vector<8x128xf32>
    %cst_74 = arith.constant 1.000000e+00 : f32
    %157 = vector.broadcast %cst_74 : f32 to vector<8x128xf32>
    %158 = arith.addf %157, %134 : vector<8x128xf32>
    %159 = arith.cmpf ogt, %156, %158 : vector<8x128xf32>
    %160 = arith.extui %159 : vector<8x128xi1> to vector<8x128xi32>
    %161 = arith.sitofp %160 : vector<8x128xi32> to vector<8x128xf32>
    %cst_75 = arith.constant 0.899999976 : f32
    %162 = vector.broadcast %cst_75 : f32 to vector<8x128xf32>
    %163 = arith.mulf %162, %134 : vector<8x128xf32>
    %164 = arith.addf %163, %161 : vector<8x128xf32>
    %165 = arith.index_cast %c4_i32 : i32 to index
    %c0_76 = arith.constant 0 : index
    %c0_77 = arith.constant 0 : index
    %166 = vector.load %arg16[%165, %c0_76, %c0_77] : memref<8x8x128xf32, #tpu.memory_space<vmem>>, vector<1x8x128xf32>
    %167 = vector.shape_cast %166 : vector<1x8x128xf32> to vector<8x128xf32>
    %168 = vector.shape_cast %161 : vector<8x128xf32> to vector<1x8x128xf32>
    tpu.vector_store %arg16[%165, %c0_76, %c0_77], %168 {strides = array<i32>} : memref<8x8x128xf32, #tpu.memory_space<vmem>>, vector<1x8x128xf32>,
    %169 = arith.addf %139, %161 : vector<8x128xf32>
    %c5_i32 = arith.constant 5 : i32
    %170 = arith.index_cast %c5_i32 : i32 to index
    %c0_78 = arith.constant 0 : index
    %c0_79 = arith.constant 0 : index
    %171 = vector.load %arg15[%170, %c0_78, %c0_79] : memref<8x8x128xf32, #tpu.memory_space<vmem>>, vector<1x8x128xf32>
    %172 = vector.shape_cast %171 : vector<1x8x128xf32> to vector<8x128xf32>
    %173 = arith.truncf %161 : vector<8x128xf32> to vector<8x128xbf16>
    %c0_80 = arith.constant 0 : index
    %c0_81 = arith.constant 0 : index
    %174 = vector.load %arg4[%c0_80, %c0_81] : memref<128x128xbf16, #tpu.memory_space<vmem>>, vector<128x128xbf16>
    %cst_82 = arith.constant dense<0.000000e+00> : vector<8x128xf32>
    %175 = tpu.matmul %173, %174, %cst_82 {dimension_numbers = #tpu.dot_dimension_numbers<[1], [0], [0], [1], [0, 0, 1, 1], [], []>} : vector<8x128xbf16>, vector<128x128xbf16>, vector<8x128xf32> -> vector<8x128xf32>
    %176 = arith.addf %172, %175 : vector<8x128xf32>
    %177 = arith.mulf %14, %153 : vector<8x128xf32>
    %178 = arith.subf %176, %177 : vector<8x128xf32>
    %179 = arith.mulf %11, %156 : vector<8x128xf32>
    %180 = arith.subf %178, %179 : vector<8x128xf32>
    %cst_83 = arith.constant 0.00999999977 : f32
    %181 = vector.broadcast %cst_83 : f32 to vector<8x128xf32>
    %182 = arith.mulf %181, %180 : vector<8x128xf32>
    %183 = arith.addf %153, %182 : vector<8x128xf32>
    %cst_84 = arith.constant 0.00999999977 : f32
    %184 = vector.broadcast %cst_84 : f32 to vector<8x128xf32>
    %185 = arith.mulf %184, %183 : vector<8x128xf32>
    %186 = arith.addf %156, %185 : vector<8x128xf32>
    %cst_85 = arith.constant 1.000000e+00 : f32
    %187 = vector.broadcast %cst_85 : f32 to vector<8x128xf32>
    %188 = arith.addf %187, %164 : vector<8x128xf32>
    %189 = arith.cmpf ogt, %186, %188 : vector<8x128xf32>
    %190 = arith.extui %189 : vector<8x128xi1> to vector<8x128xi32>
    %191 = arith.sitofp %190 : vector<8x128xi32> to vector<8x128xf32>
    %cst_86 = arith.constant 0.899999976 : f32
    %192 = vector.broadcast %cst_86 : f32 to vector<8x128xf32>
    %193 = arith.mulf %192, %164 : vector<8x128xf32>
    %194 = arith.addf %193, %191 : vector<8x128xf32>
    %195 = arith.index_cast %c5_i32 : i32 to index
    %c0_87 = arith.constant 0 : index
    %c0_88 = arith.constant 0 : index
    %196 = vector.load %arg16[%195, %c0_87, %c0_88] : memref<8x8x128xf32, #tpu.memory_space<vmem>>, vector<1x8x128xf32>
    %197 = vector.shape_cast %196 : vector<1x8x128xf32> to vector<8x128xf32>
    %198 = vector.shape_cast %191 : vector<8x128xf32> to vector<1x8x128xf32>
    tpu.vector_store %arg16[%195, %c0_87, %c0_88], %198 {strides = array<i32>} : memref<8x8x128xf32, #tpu.memory_space<vmem>>, vector<1x8x128xf32>,
    %199 = arith.addf %169, %191 : vector<8x128xf32>
    %c6_i32 = arith.constant 6 : i32
    %200 = arith.index_cast %c6_i32 : i32 to index
    %c0_89 = arith.constant 0 : index
    %c0_90 = arith.constant 0 : index
    %201 = vector.load %arg15[%200, %c0_89, %c0_90] : memref<8x8x128xf32, #tpu.memory_space<vmem>>, vector<1x8x128xf32>
    %202 = vector.shape_cast %201 : vector<1x8x128xf32> to vector<8x128xf32>
    %203 = arith.truncf %191 : vector<8x128xf32> to vector<8x128xbf16>
    %c0_91 = arith.constant 0 : index
    %c0_92 = arith.constant 0 : index
    %204 = vector.load %arg4[%c0_91, %c0_92] : memref<128x128xbf16, #tpu.memory_space<vmem>>, vector<128x128xbf16>
    %cst_93 = arith.constant dense<0.000000e+00> : vector<8x128xf32>
    %205 = tpu.matmul %203, %204, %cst_93 {dimension_numbers = #tpu.dot_dimension_numbers<[1], [0], [0], [1], [0, 0, 1, 1], [], []>} : vector<8x128xbf16>, vector<128x128xbf16>, vector<8x128xf32> -> vector<8x128xf32>
    %206 = arith.addf %202, %205 : vector<8x128xf32>
    %207 = arith.mulf %14, %183 : vector<8x128xf32>
    %208 = arith.subf %206, %207 : vector<8x128xf32>
    %209 = arith.mulf %11, %186 : vector<8x128xf32>
    %210 = arith.subf %208, %209 : vector<8x128xf32>
    %cst_94 = arith.constant 0.00999999977 : f32
    %211 = vector.broadcast %cst_94 : f32 to vector<8x128xf32>
    %212 = arith.mulf %211, %210 : vector<8x128xf32>
    %213 = arith.addf %183, %212 : vector<8x128xf32>
    %cst_95 = arith.constant 0.00999999977 : f32
    %214 = vector.broadcast %cst_95 : f32 to vector<8x128xf32>
    %215 = arith.mulf %214, %213 : vector<8x128xf32>
    %216 = arith.addf %186, %215 : vector<8x128xf32>
    %cst_96 = arith.constant 1.000000e+00 : f32
    %217 = vector.broadcast %cst_96 : f32 to vector<8x128xf32>
    %218 = arith.addf %217, %194 : vector<8x128xf32>
    %219 = arith.cmpf ogt, %216, %218 : vector<8x128xf32>
    %220 = arith.extui %219 : vector<8x128xi1> to vector<8x128xi32>
    %221 = arith.sitofp %220 : vector<8x128xi32> to vector<8x128xf32>
    %cst_97 = arith.constant 0.899999976 : f32
    %222 = vector.broadcast %cst_97 : f32 to vector<8x128xf32>
    %223 = arith.mulf %222, %194 : vector<8x128xf32>
    %224 = arith.addf %223, %221 : vector<8x128xf32>
    %225 = arith.index_cast %c6_i32 : i32 to index
    %c0_98 = arith.constant 0 : index
    %c0_99 = arith.constant 0 : index
    %226 = vector.load %arg16[%225, %c0_98, %c0_99] : memref<8x8x128xf32, #tpu.memory_space<vmem>>, vector<1x8x128xf32>
    %227 = vector.shape_cast %226 : vector<1x8x128xf32> to vector<8x128xf32>
    %228 = vector.shape_cast %221 : vector<8x128xf32> to vector<1x8x128xf32>
    tpu.vector_store %arg16[%225, %c0_98, %c0_99], %228 {strides = array<i32>} : memref<8x8x128xf32, #tpu.memory_space<vmem>>, vector<1x8x128xf32>,
    %229 = arith.addf %199, %221 : vector<8x128xf32>
    %c7_i32 = arith.constant 7 : i32
    %230 = arith.index_cast %c7_i32 : i32 to index
    %c0_100 = arith.constant 0 : index
    %c0_101 = arith.constant 0 : index
    %231 = vector.load %arg15[%230, %c0_100, %c0_101] : memref<8x8x128xf32, #tpu.memory_space<vmem>>, vector<1x8x128xf32>
    %232 = vector.shape_cast %231 : vector<1x8x128xf32> to vector<8x128xf32>
    %233 = arith.truncf %221 : vector<8x128xf32> to vector<8x128xbf16>
    %c0_102 = arith.constant 0 : index
    %c0_103 = arith.constant 0 : index
    %234 = vector.load %arg4[%c0_102, %c0_103] : memref<128x128xbf16, #tpu.memory_space<vmem>>, vector<128x128xbf16>
    %cst_104 = arith.constant dense<0.000000e+00> : vector<8x128xf32>
    %235 = tpu.matmul %233, %234, %cst_104 {dimension_numbers = #tpu.dot_dimension_numbers<[1], [0], [0], [1], [0, 0, 1, 1], [], []>} : vector<8x128xbf16>, vector<128x128xbf16>, vector<8x128xf32> -> vector<8x128xf32>
    %236 = arith.addf %232, %235 : vector<8x128xf32>
    %237 = arith.mulf %14, %213 : vector<8x128xf32>
    %238 = arith.subf %236, %237 : vector<8x128xf32>
    %239 = arith.mulf %11, %216 : vector<8x128xf32>
    %240 = arith.subf %238, %239 : vector<8x128xf32>
    %cst_105 = arith.constant 0.00999999977 : f32
    %241 = vector.broadcast %cst_105 : f32 to vector<8x128xf32>
    %242 = arith.mulf %241, %240 : vector<8x128xf32>
    %243 = arith.addf %213, %242 : vector<8x128xf32>
    %cst_106 = arith.constant 0.00999999977 : f32
    %244 = vector.broadcast %cst_106 : f32 to vector<8x128xf32>
    %245 = arith.mulf %244, %243 : vector<8x128xf32>
    %246 = arith.addf %216, %245 : vector<8x128xf32>
    %cst_107 = arith.constant 1.000000e+00 : f32
    %247 = vector.broadcast %cst_107 : f32 to vector<8x128xf32>
    %248 = arith.addf %247, %224 : vector<8x128xf32>
    %249 = arith.cmpf ogt, %246, %248 : vector<8x128xf32>
    %250 = arith.extui %249 : vector<8x128xi1> to vector<8x128xi32>
    %251 = arith.sitofp %250 : vector<8x128xi32> to vector<8x128xf32>
    %cst_108 = arith.constant 0.899999976 : f32
    %252 = vector.broadcast %cst_108 : f32 to vector<8x128xf32>
    %253 = arith.mulf %252, %224 : vector<8x128xf32>
    %254 = arith.addf %253, %251 : vector<8x128xf32>
    %255 = arith.index_cast %c7_i32 : i32 to index
    %c0_109 = arith.constant 0 : index
    %c0_110 = arith.constant 0 : index
    %256 = vector.load %arg16[%255, %c0_109, %c0_110] : memref<8x8x128xf32, #tpu.memory_space<vmem>>, vector<1x8x128xf32>
    %257 = vector.shape_cast %256 : vector<1x8x128xf32> to vector<8x128xf32>
    %258 = vector.shape_cast %251 : vector<8x128xf32> to vector<1x8x128xf32>
    tpu.vector_store %arg16[%255, %c0_109, %c0_110], %258 {strides = array<i32>} : memref<8x8x128xf32, #tpu.memory_space<vmem>>, vector<1x8x128xf32>,
    %259 = arith.addf %229, %251 : vector<8x128xf32>
    %c8_i32 = arith.constant 8 : i32
    %c0_111 = arith.constant 0 : index
    %c0_112 = arith.constant 0 : index
    %260 = vector.load %arg18[%c0_111, %c0_112] : memref<8x128xf32, #tpu.memory_space<vmem>>, vector<8x128xf32>
    tpu.vector_store %arg18[%c0_111, %c0_112], %246 {strides = array<i32>} : memref<8x128xf32, #tpu.memory_space<vmem>>, vector<8x128xf32>,
    %c0_113 = arith.constant 0 : index
    %c0_114 = arith.constant 0 : index
    %261 = vector.load %arg19[%c0_113, %c0_114] : memref<8x128xf32, #tpu.memory_space<vmem>>, vector<8x128xf32>
    tpu.vector_store %arg19[%c0_113, %c0_114], %243 {strides = array<i32>} : memref<8x128xf32, #tpu.memory_space<vmem>>, vector<8x128xf32>,
    %c0_115 = arith.constant 0 : index
    %c0_116 = arith.constant 0 : index
    %262 = vector.load %arg20[%c0_115, %c0_116] : memref<8x128xf32, #tpu.memory_space<vmem>>, vector<8x128xf32>
    tpu.vector_store %arg20[%c0_115, %c0_116], %254 {strides = array<i32>} : memref<8x128xf32, #tpu.memory_space<vmem>>, vector<8x128xf32>,
    %c0_117 = arith.constant 0 : index
    %c0_118 = arith.constant 0 : index
    %263 = vector.load %arg21[%c0_117, %c0_118] : memref<8x128xf32, #tpu.memory_space<vmem>>, vector<8x128xf32>
    tpu.vector_store %arg21[%c0_117, %c0_118], %251 {strides = array<i32>} : memref<8x128xf32, #tpu.memory_space<vmem>>, vector<8x128xf32>,
    %c0_119 = arith.constant 0 : index
    %c0_120 = arith.constant 0 : index
    %264 = vector.load %arg23[%c0_119, %c0_120] : memref<8x128xf32, #tpu.memory_space<vmem>>, vector<8x128xf32>
    tpu.vector_store %arg23[%c0_119, %c0_120], %259 {strides = array<i32>} : memref<8x128xf32, #tpu.memory_space<vmem>>, vector<8x128xf32>,
    %c0_121 = arith.constant 0 : index
    %c0_122 = arith.constant 0 : index
    %c0_123 = arith.constant 0 : index
    %265 = vector.load %arg16[%c0_121, %c0_122, %c0_123] : memref<8x8x128xf32, #tpu.memory_space<vmem>>, vector<8x8x128xf32>
    %266 = vector.shape_cast %265 : vector<8x8x128xf32> to vector<64x128xf32>
    %267 = arith.truncf %266 : vector<64x128xf32> to vector<64x128xbf16>
    %c0_124 = arith.constant 0 : index
    %c0_125 = arith.constant 0 : index
    %268 = vector.load %arg5[%c0_124, %c0_125] : memref<128x128xbf16, #tpu.memory_space<vmem>>, vector<128x128xbf16>
    %cst_126 = arith.constant dense<0.000000e+00> : vector<64x128xf32>
    %269 = tpu.matmul %267, %268, %cst_126 {dimension_numbers = #tpu.dot_dimension_numbers<[1], [0], [0], [1], [0, 0, 1, 1], [], []>} : vector<64x128xbf16>, vector<128x128xbf16>, vector<64x128xf32> -> vector<64x128xf32>
    %270 = vector.shape_cast %269 : vector<64x128xf32> to vector<8x8x128xf32>
    %c0_127 = arith.constant 0 : index
    %c0_128 = arith.constant 0 : index
    %c0_129 = arith.constant 0 : index
    %271 = vector.load %arg17[%c0_127, %c0_128, %c0_129] : memref<8x8x128xf32, #tpu.memory_space<vmem>>, vector<8x8x128xf32>
    tpu.vector_store %arg17[%c0_127, %c0_128, %c0_129], %270 {strides = array<i32>} : memref<8x8x128xf32, #tpu.memory_space<vmem>>, vector<8x8x128xf32>,
    %c0_130 = arith.constant 0 : index
    %c0_131 = arith.constant 0 : index
    %272 = vector.load %arg8[%c0_130, %c0_131] : memref<1x128xf32, #tpu.memory_space<vmem>>, vector<1x128xf32>
    %273 = vector.shape_cast %272 : vector<1x128xf32> to vector<1x128xf32>
    %274 = vector.broadcast %273 : vector<1x128xf32> to vector<8x128xf32>
    %c0_132 = arith.constant 0 : index
    %c0_133 = arith.constant 0 : index
    %275 = vector.load %arg9[%c0_132, %c0_133] : memref<1x128xf32, #tpu.memory_space<vmem>>, vector<1x128xf32>
    %276 = vector.shape_cast %275 : vector<1x128xf32> to vector<1x128xf32>
    %277 = vector.broadcast %276 : vector<1x128xf32> to vector<8x128xf32>
    %c0_134 = arith.constant 0 : index
    %c0_135 = arith.constant 0 : index
    %278 = vector.load %arg22[%c0_134, %c0_135] : memref<8x128xf32, #tpu.memory_space<vmem>>, vector<8x128xf32>
    %c0_i32_136 = arith.constant 0 : i32
    %279 = arith.mulf %274, %278 : vector<8x128xf32>
    %280 = arith.index_cast %c0_i32_136 : i32 to index
    %c0_137 = arith.constant 0 : index
    %c0_138 = arith.constant 0 : index
    %281 = vector.load %arg17[%280, %c0_137, %c0_138] : memref<8x8x128xf32, #tpu.memory_space<vmem>>, vector<1x8x128xf32>
    %282 = vector.shape_cast %281 : vector<1x8x128xf32> to vector<8x128xf32>
    %283 = arith.mulf %277, %282 : vector<8x128xf32>
    %284 = arith.addf %279, %283 : vector<8x128xf32>
    %285 = arith.index_cast %c0_i32_136 : i32 to index
    %c0_139 = arith.constant 0 : index
    %c0_140 = arith.constant 0 : index
    %286 = vector.load %arg10[%285, %c0_139, %c0_140] : memref<8x8x128xf32, #tpu.memory_space<vmem>>, vector<1x8x128xf32>
    %287 = vector.shape_cast %286 : vector<1x8x128xf32> to vector<8x128xf32>
    %288 = vector.shape_cast %284 : vector<8x128xf32> to vector<1x8x128xf32>
    tpu.vector_store %arg10[%285, %c0_139, %c0_140], %288 {strides = array<i32>} : memref<8x8x128xf32, #tpu.memory_space<vmem>>, vector<1x8x128xf32>,
    %c1_i32_141 = arith.constant 1 : i32
    %289 = arith.mulf %274, %284 : vector<8x128xf32>
    %290 = arith.index_cast %c1_i32_141 : i32 to index
    %c0_142 = arith.constant 0 : index
    %c0_143 = arith.constant 0 : index
    %291 = vector.load %arg17[%290, %c0_142, %c0_143] : memref<8x8x128xf32, #tpu.memory_space<vmem>>, vector<1x8x128xf32>
    %292 = vector.shape_cast %291 : vector<1x8x128xf32> to vector<8x128xf32>
    %293 = arith.mulf %277, %292 : vector<8x128xf32>
    %294 = arith.addf %289, %293 : vector<8x128xf32>
    %295 = arith.index_cast %c1_i32_141 : i32 to index
    %c0_144 = arith.constant 0 : index
    %c0_145 = arith.constant 0 : index
    %296 = vector.load %arg10[%295, %c0_144, %c0_145] : memref<8x8x128xf32, #tpu.memory_space<vmem>>, vector<1x8x128xf32>
    %297 = vector.shape_cast %296 : vector<1x8x128xf32> to vector<8x128xf32>
    %298 = vector.shape_cast %294 : vector<8x128xf32> to vector<1x8x128xf32>
    tpu.vector_store %arg10[%295, %c0_144, %c0_145], %298 {strides = array<i32>} : memref<8x8x128xf32, #tpu.memory_space<vmem>>, vector<1x8x128xf32>,
    %c2_i32_146 = arith.constant 2 : i32
    %299 = arith.mulf %274, %294 : vector<8x128xf32>
    %300 = arith.index_cast %c2_i32_146 : i32 to index
    %c0_147 = arith.constant 0 : index
    %c0_148 = arith.constant 0 : index
    %301 = vector.load %arg17[%300, %c0_147, %c0_148] : memref<8x8x128xf32, #tpu.memory_space<vmem>>, vector<1x8x128xf32>
    %302 = vector.shape_cast %301 : vector<1x8x128xf32> to vector<8x128xf32>
    %303 = arith.mulf %277, %302 : vector<8x128xf32>
    %304 = arith.addf %299, %303 : vector<8x128xf32>
    %305 = arith.index_cast %c2_i32_146 : i32 to index
    %c0_149 = arith.constant 0 : index
    %c0_150 = arith.constant 0 : index
    %306 = vector.load %arg10[%305, %c0_149, %c0_150] : memref<8x8x128xf32, #tpu.memory_space<vmem>>, vector<1x8x128xf32>
    %307 = vector.shape_cast %306 : vector<1x8x128xf32> to vector<8x128xf32>
    %308 = vector.shape_cast %304 : vector<8x128xf32> to vector<1x8x128xf32>
    tpu.vector_store %arg10[%305, %c0_149, %c0_150], %308 {strides = array<i32>} : memref<8x8x128xf32, #tpu.memory_space<vmem>>, vector<1x8x128xf32>,
    %c3_i32_151 = arith.constant 3 : i32
    %309 = arith.mulf %274, %304 : vector<8x128xf32>
    %310 = arith.index_cast %c3_i32_151 : i32 to index
    %c0_152 = arith.constant 0 : index
    %c0_153 = arith.constant 0 : index
    %311 = vector.load %arg17[%310, %c0_152, %c0_153] : memref<8x8x128xf32, #tpu.memory_space<vmem>>, vector<1x8x128xf32>
    %312 = vector.shape_cast %311 : vector<1x8x128xf32> to vector<8x128xf32>
    %313 = arith.mulf %277, %312 : vector<8x128xf32>
    %314 = arith.addf %309, %313 : vector<8x128xf32>
    %315 = arith.index_cast %c3_i32_151 : i32 to index
    %c0_154 = arith.constant 0 : index
    %c0_155 = arith.constant 0 : index
    %316 = vector.load %arg10[%315, %c0_154, %c0_155] : memref<8x8x128xf32, #tpu.memory_space<vmem>>, vector<1x8x128xf32>
    %317 = vector.shape_cast %316 : vector<1x8x128xf32> to vector<8x128xf32>
    %318 = vector.shape_cast %314 : vector<8x128xf32> to vector<1x8x128xf32>
    tpu.vector_store %arg10[%315, %c0_154, %c0_155], %318 {strides = array<i32>} : memref<8x8x128xf32, #tpu.memory_space<vmem>>, vector<1x8x128xf32>,
    %c4_i32_156 = arith.constant 4 : i32
    %319 = arith.mulf %274, %314 : vector<8x128xf32>
    %320 = arith.index_cast %c4_i32_156 : i32 to index
    %c0_157 = arith.constant 0 : index
    %c0_158 = arith.constant 0 : index
    %321 = vector.load %arg17[%320, %c0_157, %c0_158] : memref<8x8x128xf32, #tpu.memory_space<vmem>>, vector<1x8x128xf32>
    %322 = vector.shape_cast %321 : vector<1x8x128xf32> to vector<8x128xf32>
    %323 = arith.mulf %277, %322 : vector<8x128xf32>
    %324 = arith.addf %319, %323 : vector<8x128xf32>
    %325 = arith.index_cast %c4_i32_156 : i32 to index
    %c0_159 = arith.constant 0 : index
    %c0_160 = arith.constant 0 : index
    %326 = vector.load %arg10[%325, %c0_159, %c0_160] : memref<8x8x128xf32, #tpu.memory_space<vmem>>, vector<1x8x128xf32>
    %327 = vector.shape_cast %326 : vector<1x8x128xf32> to vector<8x128xf32>
    %328 = vector.shape_cast %324 : vector<8x128xf32> to vector<1x8x128xf32>
    tpu.vector_store %arg10[%325, %c0_159, %c0_160], %328 {strides = array<i32>} : memref<8x8x128xf32, #tpu.memory_space<vmem>>, vector<1x8x128xf32>,
    %c5_i32_161 = arith.constant 5 : i32
    %329 = arith.mulf %274, %324 : vector<8x128xf32>
    %330 = arith.index_cast %c5_i32_161 : i32 to index
    %c0_162 = arith.constant 0 : index
    %c0_163 = arith.constant 0 : index
    %331 = vector.load %arg17[%330, %c0_162, %c0_163] : memref<8x8x128xf32, #tpu.memory_space<vmem>>, vector<1x8x128xf32>
    %332 = vector.shape_cast %331 : vector<1x8x128xf32> to vector<8x128xf32>
    %333 = arith.mulf %277, %332 : vector<8x128xf32>
    %334 = arith.addf %329, %333 : vector<8x128xf32>
    %335 = arith.index_cast %c5_i32_161 : i32 to index
    %c0_164 = arith.constant 0 : index
    %c0_165 = arith.constant 0 : index
    %336 = vector.load %arg10[%335, %c0_164, %c0_165] : memref<8x8x128xf32, #tpu.memory_space<vmem>>, vector<1x8x128xf32>
    %337 = vector.shape_cast %336 : vector<1x8x128xf32> to vector<8x128xf32>
    %338 = vector.shape_cast %334 : vector<8x128xf32> to vector<1x8x128xf32>
    tpu.vector_store %arg10[%335, %c0_164, %c0_165], %338 {strides = array<i32>} : memref<8x8x128xf32, #tpu.memory_space<vmem>>, vector<1x8x128xf32>,
    %c6_i32_166 = arith.constant 6 : i32
    %339 = arith.mulf %274, %334 : vector<8x128xf32>
    %340 = arith.index_cast %c6_i32_166 : i32 to index
    %c0_167 = arith.constant 0 : index
    %c0_168 = arith.constant 0 : index
    %341 = vector.load %arg17[%340, %c0_167, %c0_168] : memref<8x8x128xf32, #tpu.memory_space<vmem>>, vector<1x8x128xf32>
    %342 = vector.shape_cast %341 : vector<1x8x128xf32> to vector<8x128xf32>
    %343 = arith.mulf %277, %342 : vector<8x128xf32>
    %344 = arith.addf %339, %343 : vector<8x128xf32>
    %345 = arith.index_cast %c6_i32_166 : i32 to index
    %c0_169 = arith.constant 0 : index
    %c0_170 = arith.constant 0 : index
    %346 = vector.load %arg10[%345, %c0_169, %c0_170] : memref<8x8x128xf32, #tpu.memory_space<vmem>>, vector<1x8x128xf32>
    %347 = vector.shape_cast %346 : vector<1x8x128xf32> to vector<8x128xf32>
    %348 = vector.shape_cast %344 : vector<8x128xf32> to vector<1x8x128xf32>
    tpu.vector_store %arg10[%345, %c0_169, %c0_170], %348 {strides = array<i32>} : memref<8x8x128xf32, #tpu.memory_space<vmem>>, vector<1x8x128xf32>,
    %c7_i32_171 = arith.constant 7 : i32
    %349 = arith.mulf %274, %344 : vector<8x128xf32>
    %350 = arith.index_cast %c7_i32_171 : i32 to index
    %c0_172 = arith.constant 0 : index
    %c0_173 = arith.constant 0 : index
    %351 = vector.load %arg17[%350, %c0_172, %c0_173] : memref<8x8x128xf32, #tpu.memory_space<vmem>>, vector<1x8x128xf32>
    %352 = vector.shape_cast %351 : vector<1x8x128xf32> to vector<8x128xf32>
    %353 = arith.mulf %277, %352 : vector<8x128xf32>
    %354 = arith.addf %349, %353 : vector<8x128xf32>
    %355 = arith.index_cast %c7_i32_171 : i32 to index
    %c0_174 = arith.constant 0 : index
    %c0_175 = arith.constant 0 : index
    %356 = vector.load %arg10[%355, %c0_174, %c0_175] : memref<8x8x128xf32, #tpu.memory_space<vmem>>, vector<1x8x128xf32>
    %357 = vector.shape_cast %356 : vector<1x8x128xf32> to vector<8x128xf32>
    %358 = vector.shape_cast %354 : vector<8x128xf32> to vector<1x8x128xf32>
    tpu.vector_store %arg10[%355, %c0_174, %c0_175], %358 {strides = array<i32>} : memref<8x8x128xf32, #tpu.memory_space<vmem>>, vector<1x8x128xf32>,
    %c8_i32_176 = arith.constant 8 : i32
    %c0_177 = arith.constant 0 : index
    %c0_178 = arith.constant 0 : index
    %359 = vector.load %arg22[%c0_177, %c0_178] : memref<8x128xf32, #tpu.memory_space<vmem>>, vector<8x128xf32>
    tpu.vector_store %arg22[%c0_177, %c0_178], %354 {strides = array<i32>} : memref<8x128xf32, #tpu.memory_space<vmem>>, vector<8x128xf32>,
    %c0_i32_179 = arith.constant 0 : i32
    %360 = arith.cmpi eq, %arg1, %c0_i32_179 : i32
    %361 = arith.extui %360 : i1 to i32
    %c0_i32_180 = arith.constant 0 : i32
    %362 = arith.cmpi ne, %361, %c0_i32_180 : i32
    scf.if %362 {
      %c0_181 = arith.constant 0 : index
      %c0_182 = arith.constant 0 : index
      %363 = vector.load %arg11[%c0_181, %c0_182] : memref<8x128xf32, #tpu.memory_space<vmem>>, vector<8x128xf32>
      tpu.vector_store %arg11[%c0_181, %c0_182], %251 {strides = array<i32>} : memref<8x128xf32, #tpu.memory_space<vmem>>, vector<8x128xf32>,
      %c0_183 = arith.constant 0 : index
      %c0_184 = arith.constant 0 : index
      %364 = vector.load %arg12[%c0_183, %c0_184] : memref<8x128xf32, #tpu.memory_space<vmem>>, vector<8x128xf32>
      tpu.vector_store %arg12[%c0_183, %c0_184], %246 {strides = array<i32>} : memref<8x128xf32, #tpu.memory_space<vmem>>, vector<8x128xf32>,
      %c0_185 = arith.constant 0 : index
      %c0_186 = arith.constant 0 : index
      %365 = vector.load %arg13[%c0_185, %c0_186] : memref<8x128xf32, #tpu.memory_space<vmem>>, vector<8x128xf32>
      tpu.vector_store %arg13[%c0_185, %c0_186], %354 {strides = array<i32>} : memref<8x128xf32, #tpu.memory_space<vmem>>, vector<8x128xf32>,
      %366 = vector.shape_cast %259 : vector<8x128xf32> to vector<1x8x128xf32>
      %cst_187 = arith.constant dense<0.000000e+00> : vector<1xf32>
      %367 = vector.multi_reduction <add>, %366, %cst_187 [1, 2] : vector<1x8x128xf32> to vector<1xf32>
      %368 = vector.shape_cast %367 : vector<1xf32> to vector<1x1x1xf32>
      %369 = vector.extract %368[0, 0, 0] : f32 from vector<1x1x1xf32>
      %370 = vector.broadcast %369 : f32 to vector<1x8x128xf32>
      %c0_188 = arith.constant 0 : index
      %c0_189 = arith.constant 0 : index
      %c0_190 = arith.constant 0 : index
      %371 = vector.load %arg14[%c0_188, %c0_189, %c0_190] : memref<1x8x128xf32, #tpu.memory_space<vmem>>, vector<1x8x128xf32>
      tpu.vector_store %arg14[%c0_188, %c0_189, %c0_190], %370 {strides = array<i32>} : memref<1x8x128xf32, #tpu.memory_space<vmem>>, vector<1x8x128xf32>,
    } else {
    }
    return
  }
  func.func @transform_0(%arg0: i32, %arg1: i32) -> (i32, i32, i32) {
    %c0_i32 = arith.constant 0 : i32
    %c0_i32_0 = arith.constant 0 : i32
    return %arg0, %arg1, %c0_i32 : i32, i32, i32
  }
  func.func @transform_1(%arg0: i32, %arg1: i32) -> (i32, i32) {
    %c0_i32 = arith.constant 0 : i32
    %c0_i32_0 = arith.constant 0 : i32
    %c0_i32_1 = arith.constant 0 : i32
    return %c0_i32, %c0_i32_0 : i32, i32
  }
  func.func @transform_2(%arg0: i32, %arg1: i32) -> (i32, i32) {
    %c0_i32 = arith.constant 0 : i32
    %c0_i32_0 = arith.constant 0 : i32
    %c0_i32_1 = arith.constant 0 : i32
    return %c0_i32, %c0_i32_0 : i32, i32
  }
  func.func @transform_3(%arg0: i32, %arg1: i32) -> (i32, i32) {
    %c0_i32 = arith.constant 0 : i32
    %c0_i32_0 = arith.constant 0 : i32
    %c0_i32_1 = arith.constant 0 : i32
    return %c0_i32, %c0_i32_0 : i32, i32
  }
  func.func @transform_4(%arg0: i32, %arg1: i32) -> (i32, i32) {
    %c0_i32 = arith.constant 0 : i32
    %c0_i32_0 = arith.constant 0 : i32
    %c0_i32_1 = arith.constant 0 : i32
    return %c0_i32, %c0_i32_0 : i32, i32
  }
  func.func @transform_5(%arg0: i32, %arg1: i32) -> (i32, i32) {
    %c0_i32 = arith.constant 0 : i32
    %c0_i32_0 = arith.constant 0 : i32
    %c0_i32_1 = arith.constant 0 : i32
    return %c0_i32, %c0_i32_0 : i32, i32
  }
  func.func @transform_6(%arg0: i32, %arg1: i32) -> (i32, i32) {
    %c0_i32 = arith.constant 0 : i32
    %c0_i32_0 = arith.constant 0 : i32
    %c0_i32_1 = arith.constant 0 : i32
    return %c0_i32, %c0_i32_0 : i32, i32
  }
  func.func @transform_7(%arg0: i32, %arg1: i32) -> (i32, i32) {
    %c0_i32 = arith.constant 0 : i32
    %c0_i32_0 = arith.constant 0 : i32
    %c0_i32_1 = arith.constant 0 : i32
    return %c0_i32, %c0_i32_0 : i32, i32
  }
  func.func @transform_8(%arg0: i32, %arg1: i32) -> (i32, i32, i32) {
    %c0_i32 = arith.constant 0 : i32
    %c0_i32_0 = arith.constant 0 : i32
    return %arg1, %arg0, %c0_i32 : i32, i32, i32
  }
  func.func @transform_9(%arg0: i32, %arg1: i32) -> (i32, i32) {
    %c0_i32 = arith.constant 0 : i32
    %c0_i32_0 = arith.constant 0 : i32
    return %arg0, %c0_i32 : i32, i32
  }
  func.func @transform_10(%arg0: i32, %arg1: i32) -> (i32, i32) {
    %c0_i32 = arith.constant 0 : i32
    %c0_i32_0 = arith.constant 0 : i32
    return %arg0, %c0_i32 : i32, i32
  }
  func.func @transform_11(%arg0: i32, %arg1: i32) -> (i32, i32) {
    %c0_i32 = arith.constant 0 : i32
    %c0_i32_0 = arith.constant 0 : i32
    return %arg0, %c0_i32 : i32, i32
  }
  func.func @transform_12(%arg0: i32, %arg1: i32) -> (i32, i32, i32) {
    %c0_i32 = arith.constant 0 : i32
    %c0_i32_0 = arith.constant 0 : i32
    %c0_i32_1 = arith.constant 0 : i32
    return %arg0, %c0_i32, %c0_i32_0 : i32, i32, i32
  }
}

</mosaic_0001>

<llo_original>
// kernel: simple_harmonic_rnn.1
$region0: #{simple_harmonic_rnn.1}
  #allocation0 [shape = 'u32[]', space=smem, size = 0x4, offset = 0x4, fixed_abs, tag = 'smem constant byte address 0x4 - core index']
  #allocation1 [shape = 'u32[144,128]{1,0:T(1,128)}', space=vmem, size = 0x12000, scoped, tag = 'internal scratch']
  #allocation2 [shape = 'f32[8,8,128]{2,1,0:T(8,128)}', space=vmem, size = 0x8000, scoped, tag = 'scratch operand']
  #allocation3 [shape = 'f32[8,8,128]{2,1,0:T(8,128)}', space=vmem, size = 0x8000, scoped, tag = 'scratch operand']
  #allocation4 [shape = 'f32[8,8,128]{2,1,0:T(8,128)}', space=vmem, size = 0x8000, scoped, tag = 'scratch operand']
  #allocation5 [shape = 'f32[8,128]{1,0:T(8,128)}', space=vmem, size = 0x1000, scoped, tag = 'scratch operand']
  #allocation6 [shape = 'f32[8,128]{1,0:T(8,128)}', space=vmem, size = 0x1000, scoped, tag = 'scratch operand']
  #allocation7 [shape = 'f32[8,128]{1,0:T(8,128)}', space=vmem, size = 0x1000, scoped, tag = 'scratch operand']
  #allocation8 [shape = 'f32[8,128]{1,0:T(8,128)}', space=vmem, size = 0x1000, scoped, tag = 'scratch operand']
  #allocation9 [shape = 'f32[8,128]{1,0:T(8,128)}', space=vmem, size = 0x1000, scoped, tag = 'scratch operand']
  #allocation10 [shape = 'f32[8,128]{1,0:T(8,128)}', space=vmem, size = 0x1000, scoped, tag = 'scratch operand']
  %s0 = inlined_call_operand.vmem [shape: bf16[1,64,128], index: 0, kind: input, shape index: {}]
  %s1 = inlined_call_operand.vmem [shape: bf16[128,128], index: 1, kind: input, shape index: {}]
  %s2 = inlined_call_operand.vmem [shape: bf16[128,128], index: 2, kind: input, shape index: {}]
  %s3 = inlined_call_operand.vmem [shape: bf16[128,128], index: 3, kind: input, shape index: {}]
  %s4 = inlined_call_operand.vmem [shape: f32[1,128], index: 4, kind: input, shape index: {}]
  %s5 = inlined_call_operand.vmem [shape: f32[1,128], index: 5, kind: input, shape index: {}]
  %s6 = inlined_call_operand.vmem [shape: f32[1,128], index: 6, kind: input, shape index: {}]
  %s7 = inlined_call_operand.vmem [shape: f32[1,128], index: 7, kind: input, shape index: {}]
  %s8 = inlined_call_operand.vmem [shape: f32[8,8,128], index: 8, kind: output, shape index: {0}]
  %s9 = inlined_call_operand.vmem [shape: f32[8,128], index: 9, kind: output, shape index: {1}]
  %s10 = inlined_call_operand.vmem [shape: f32[8,128], index: 10, kind: output, shape index: {2}]
  %s11 = inlined_call_operand.vmem [shape: f32[8,128], index: 11, kind: output, shape index: {3}]
  %s12 = inlined_call_operand.vmem [shape: f32[1,8,128], index: 12, kind: output, shape index: {4}]
  %13 = xla_tuple %s8, %s9, %s10, %s11, %s12
  %s14 = sld [smem:[#allocation0]]
  $region82: #{simple_harmonic_rnn.1} parent=0
    _
  %s16 = ssub.s32 1, %s14
  %s17 = scalar_select 0, %s16, %s14
  // Predicated region
  $region2: #{simple_harmonic_rnn.1} parent=0 // pred_check
    _
  $region3: #{simple_harmonic_rnn.1} parent=0 // pred_check_branch
    %19 = sbr.rel (0) target = $region5
  $region4: #{simple_harmonic_rnn.1} parent=0 // pred_region
    _
  $region5: #{simple_harmonic_rnn.1} parent=0 // pred_fallthru
    _
  // Predicated region
  $region6: #{simple_harmonic_rnn.1} parent=0 // pred_check
    _
  $region7: #{simple_harmonic_rnn.1} parent=0 // pred_check_branch
    %21 = sbr.rel (0) target = $region9
  $region8: #{simple_harmonic_rnn.1} parent=0 // pred_region
    _
  $region9: #{simple_harmonic_rnn.1} parent=0 // pred_fallthru
    _
  // Predicated region
  $region10: #{simple_harmonic_rnn.1} parent=0 // pred_check
    _
  $region11: #{simple_harmonic_rnn.1} parent=0 // pred_check_branch
    %23 = sbr.rel (0) target = $region13
  $region12: #{simple_harmonic_rnn.1} parent=0 // pred_region
    _
  $region13: #{simple_harmonic_rnn.1} parent=0 // pred_fallthru
    _
  // Predicated region
  $region14: #{simple_harmonic_rnn.1} parent=0 // pred_check
    _
  $region15: #{simple_harmonic_rnn.1} parent=0 // pred_check_branch
    %25 = sbr.rel (0) target = $region17
  $region16: #{simple_harmonic_rnn.1} parent=0 // pred_region
    _
  $region17: #{simple_harmonic_rnn.1} parent=0 // pred_fallthru
    _
  // Predicated region
  $region18: #{simple_harmonic_rnn.1} parent=0 // pred_check
    _
  $region19: #{simple_harmonic_rnn.1} parent=0 // pred_check_branch
    %27 = sbr.rel (0) target = $region21
  $region20: #{simple_harmonic_rnn.1} parent=0 // pred_region
    _
  $region21: #{simple_harmonic_rnn.1} parent=0 // pred_fallthru
    _
  // Predicated region
  $region22: #{simple_harmonic_rnn.1} parent=0 // pred_check
    _
  $region23: #{simple_harmonic_rnn.1} parent=0 // pred_check_branch
    %29 = sbr.rel (0) target = $region25
  $region24: #{simple_harmonic_rnn.1} parent=0 // pred_region
    _
  $region25: #{simple_harmonic_rnn.1} parent=0 // pred_fallthru
    _
  // Predicated region
  $region26: #{simple_harmonic_rnn.1} parent=0 // pred_check
    _
  $region27: #{simple_harmonic_rnn.1} parent=0 // pred_check_branch
    %31 = sbr.rel (0) target = $region29
  $region28: #{simple_harmonic_rnn.1} parent=0 // pred_region
    _
  $region29: #{simple_harmonic_rnn.1} parent=0 // pred_fallthru
    _
  // Predicated region
  $region30: #{simple_harmonic_rnn.1} parent=0 // pred_check
    _
  $region31: #{simple_harmonic_rnn.1} parent=0 // pred_check_branch
    %33 = sbr.rel (0) target = $region33
  $region32: #{simple_harmonic_rnn.1} parent=0 // pred_region
    _
  $region33: #{simple_harmonic_rnn.1} parent=0 // pred_fallthru
    _
  %p35 = scmp.eq.s32.totalorder 0, 0
  // Predicated region
  $region34: #{simple_harmonic_rnn.1} parent=0 // pred_check
    %p36 = pneg %p35
  $region35: #{simple_harmonic_rnn.1} parent=0 // pred_check_branch
    %38 = sbr.rel (%p36) target = $region37
  $region36: #{simple_harmonic_rnn.1} parent=0 // pred_region
    %39 = vst [vmem:[#allocation5] sm:$0xff] 0.0
    %40 = vst [vmem:[#allocation6] sm:$0xff] 0.0
    %41 = vst [vmem:[#allocation7] sm:$0xff] 0.0
    %42 = vst [vmem:[#allocation8] sm:$0xff] 0.0
    %43 = vst [vmem:[#allocation10] sm:$0xff] 0.0
    %44 = vst [vmem:[#allocation9] sm:$0xff] 0.0
  $region37: #{simple_harmonic_rnn.1} parent=0 // pred_fallthru
    _
  %v45 = vld [vmem:[%s0] sm:$0xf]
  %v46 = vld [vmem:[%s0 + $0x4] sm:$0xf]
  %v47 = vld [vmem:[%s0 + $0x8] sm:$0xf]
  %v48 = vld [vmem:[%s0 + $0xc] sm:$0xf]
  %v49 = vld [vmem:[%s0 + $0x10] sm:$0xf]
  %v50 = vld [vmem:[%s0 + $0x14] sm:$0xf]
  %v51 = vld [vmem:[%s0 + $0x18] sm:$0xf]
  %v52 = vld [vmem:[%s0 + $0x1c] sm:$0xf]
  %v53 = vld [vmem:[%s1] sm:$0xf]
  %v54 = vld [vmem:[%s1 + $0x4] sm:$0xf]
  %v55 = vld [vmem:[%s1 + $0x8] sm:$0xf]
  %v56 = vld [vmem:[%s1 + $0xc] sm:$0xf]
  %v57 = vld [vmem:[%s1 + $0x10] sm:$0xf]
  %v58 = vld [vmem:[%s1 + $0x14] sm:$0xf]
  %v59 = vld [vmem:[%s1 + $0x18] sm:$0xf]
  %v60 = vld [vmem:[%s1 + $0x1c] sm:$0xf]
  %v61 = vld [vmem:[%s1 + $0x20] sm:$0xf]
  %v62 = vld [vmem:[%s1 + $0x24] sm:$0xf]
  %v63 = vld [vmem:[%s1 + $0x28] sm:$0xf]
  %v64 = vld [vmem:[%s1 + $0x2c] sm:$0xf]
  %v65 = vld [vmem:[%s1 + $0x30] sm:$0xf]
  %v66 = vld [vmem:[%s1 + $0x34] sm:$0xf]
  %v67 = vld [vmem:[%s1 + $0x38] sm:$0xf]
  %v68 = vld [vmem:[%s1 + $0x3c] sm:$0xf]
  %v77 = vunpack.c.l.b16 %v45
  %v78 = vunpack.c.l.b16 %v46
  %v79 = vunpack.c.l.b16 %v47
  %v80 = vunpack.c.l.b16 %v48
  %v81 = vunpack.c.l.b16 %v49
  %v82 = vunpack.c.l.b16 %v50
  %v83 = vunpack.c.l.b16 %v51
  %v84 = vunpack.c.l.b16 %v52
  %v85 = vpack.c.b16 %v78, %v77
  %v86 = vpack.c.b16 %v80, %v79
  %v87 = vpack.c.b16 %v82, %v81
  %v88 = vpack.c.b16 %v84, %v83
  %v109 = vunpack.c.l.b16 %v53
  %v110 = vunpack.c.l.b16 %v54
  %v111 = vunpack.c.l.b16 %v55
  %v112 = vunpack.c.l.b16 %v56
  %v113 = vunpack.c.l.b16 %v57
  %v114 = vunpack.c.l.b16 %v58
  %v115 = vunpack.c.l.b16 %v59
  %v116 = vunpack.c.l.b16 %v60
  %v117 = vunpack.c.l.b16 %v61
  %v118 = vunpack.c.l.b16 %v62
  %v119 = vunpack.c.l.b16 %v63
  %v120 = vunpack.c.l.b16 %v64
  %v121 = vunpack.c.l.b16 %v65
  %v122 = vunpack.c.l.b16 %v66
  %v123 = vunpack.c.l.b16 %v67
  %v124 = vunpack.c.l.b16 %v68
  %v125 = vpack.c.b16 %v110, %v109
  %v126 = vpack.c.b16 %v112, %v111
  %v127 = vpack.c.b16 %v114, %v113
  %v128 = vpack.c.b16 %v116, %v115
  %v129 = vpack.c.b16 %v118, %v117
  %v130 = vpack.c.b16 %v120, %v119
  %v131 = vpack.c.b16 %v122, %v121
  %v132 = vpack.c.b16 %v124, %v123
  %141 = vmatprep.subr.bf16.mxu0 0
  %142 = vmatpush1.bf16.msra.mxu0 %v132
  %143 = vmatprep.subr.bf16.mxu0 0
  %144 = vmatpush1.bf16.msra.mxu0 %v131
  %145 = vmatprep.subr.bf16.mxu0 0
  %146 = vmatpush1.bf16.msra.mxu0 %v130
  %147 = vmatprep.subr.bf16.mxu0 0
  %148 = vmatpush1.bf16.msra.mxu0 %v129
  %149 = vmatprep.subr.bf16.mxu0 0
  %150 = vmatpush1.bf16.msra.mxu0 %v128
  %151 = vmatprep.subr.bf16.mxu0 0
  %152 = vmatpush1.bf16.msra.mxu0 %v127
  %153 = vmatprep.subr.bf16.mxu0 0
  %154 = vmatpush1.bf16.msra.mxu0 %v126
  %155 = vmatprep.subr.bf16.mxu0 0
  %156 = vmatpush1.bf16.msra.mxu0 %v125
  %157 = vmatprep.subr.bf16.mxu0 0
  %158 = vmatpush2.bf16.msra.mxu0 0
  %159 = vmatprep.subr.bf16.mxu0 0
  %160 = vmatpush2.bf16.msra.mxu0 0
  %161 = vmatprep.subr.bf16.mxu0 0
  %162 = vmatpush2.bf16.msra.mxu0 0
  %163 = vmatprep.subr.bf16.mxu0 0
  %164 = vmatpush2.bf16.msra.mxu0 0
  %165 = vmatprep.subr.bf16.mxu0 0
  %166 = vmatpush2.bf16.msra.mxu0 0
  %167 = vmatprep.subr.bf16.mxu0 0
  %168 = vmatpush2.bf16.msra.mxu0 0
  %169 = vmatprep.subr.bf16.mxu0 0
  %170 = vmatpush2.bf16.msra.mxu0 0
  %171 = vmatprep.subr.bf16.mxu0 0
  %172 = vmatpush2.bf16.msra.mxu0 0
  %173 = vmatprep.mubr.bf16.mxu0 0
  %174 = vmatmul.mubr.bf16.gmra.mxu0 %v85
  %v175 = vpop.f32.mrf.mxu0
  %v176 = vadd.f32 0.0, %v175
  %v177 = vpop.f32.mrf.mxu0
  %v178 = vpop.f32.mrf.mxu0
  %v179 = vadd.f32 0.0, %v178
  %v180 = vpop.f32.mrf.mxu0
  %181 = vmatprep.mubr.bf16.mxu0 0
  %182 = vmatmul.mubr.bf16.gmra.mxu0 %v86
  %v183 = vpop.f32.mrf.mxu0
  %v184 = vadd.f32 0.0, %v183
  %v185 = vpop.f32.mrf.mxu0
  %v186 = vpop.f32.mrf.mxu0
  %v187 = vadd.f32 0.0, %v186
  %v188 = vpop.f32.mrf.mxu0
  %189 = vmatprep.mubr.bf16.mxu0 0
  %190 = vmatmul.mubr.bf16.gmra.mxu0 %v87
  %v191 = vpop.f32.mrf.mxu0
  %v192 = vadd.f32 0.0, %v191
  %v193 = vpop.f32.mrf.mxu0
  %v194 = vpop.f32.mrf.mxu0
  %v195 = vadd.f32 0.0, %v194
  %v196 = vpop.f32.mrf.mxu0
  %197 = vmatprep.mubr.bf16.mxu0 0
  %198 = vmatmul.mubr.bf16.gmra.mxu0 %v88
  %v199 = vpop.f32.mrf.mxu0
  %v200 = vadd.f32 0.0, %v199
  %v201 = vpop.f32.mrf.mxu0
  %v202 = vpop.f32.mrf.mxu0
  %v203 = vadd.f32 0.0, %v202
  %v204 = vpop.f32.mrf.mxu0
  %205 = vdwg.mxu0
  %206 = vst [vmem:[#allocation2] sm:$0xff] %v176
  %207 = vst [vmem:[#allocation2 + $0x8] sm:$0xff] %v179
  %208 = vst [vmem:[#allocation2 + $0x10] sm:$0xff] %v184
  %209 = vst [vmem:[#allocation2 + $0x18] sm:$0xff] %v187
  %210 = vst [vmem:[#allocation2 + $0x20] sm:$0xff] %v192
  %211 = vst [vmem:[#allocation2 + $0x28] sm:$0xff] %v195
  %212 = vst [vmem:[#allocation2 + $0x30] sm:$0xff] %v200
  %213 = vst [vmem:[#allocation2 + $0x38] sm:$0xff] %v203
  %v214 = vld [vmem:[%s4] sm:$0x1]
  %v216 = vlaneseq
  %v217 = vshrl.u32 %v216, 7
  %v218 = vsub.s32 0, %v217
  %v219 = vrot.slane %v214, %v218
  %v221 = vld [vmem:[%s5] sm:$0x1]
  %v223 = vlaneseq
  %v224 = vshrl.u32 %v223, 7
  %v225 = vsub.s32 0, %v224
  %v226 = vrot.slane %v221, %v225
  %v228 = vld [vmem:[#allocation5] sm:$0xff]
  %v229 = vld [vmem:[#allocation6] sm:$0xff]
  %v230 = vld [vmem:[#allocation7] sm:$0xff]
  %v231 = vld [vmem:[#allocation8] sm:$0xff]
  %v232 = vld [vmem:[#allocation10] sm:$0xff]
  %v233 = vld [vmem:[#allocation2] sm:$0xff]
  %v234 = vpack.c.bf16 %v231, %v231
  %v235 = vld [vmem:[%s2] sm:$0xf]
  %v236 = vld [vmem:[%s2 + $0x4] sm:$0xf]
  %v237 = vld [vmem:[%s2 + $0x8] sm:$0xf]
  %v238 = vld [vmem:[%s2 + $0xc] sm:$0xf]
  %v239 = vld [vmem:[%s2 + $0x10] sm:$0xf]
  %v240 = vld [vmem:[%s2 + $0x14] sm:$0xf]
  %v241 = vld [vmem:[%s2 + $0x18] sm:$0xf]
  %v242 = vld [vmem:[%s2 + $0x1c] sm:$0xf]
  %v243 = vld [vmem:[%s2 + $0x20] sm:$0xf]
  %v244 = vld [vmem:[%s2 + $0x24] sm:$0xf]
  %v245 = vld [vmem:[%s2 + $0x28] sm:$0xf]
  %v246 = vld [vmem:[%s2 + $0x2c] sm:$0xf]
  %v247 = vld [vmem:[%s2 + $0x30] sm:$0xf]
  %v248 = vld [vmem:[%s2 + $0x34] sm:$0xf]
  %v249 = vld [vmem:[%s2 + $0x38] sm:$0xf]
  %v250 = vld [vmem:[%s2 + $0x3c] sm:$0xf]
  %v267 = vunpack.c.l.b16 %v235
  %v268 = vunpack.c.l.b16 %v236
  %v269 = vunpack.c.l.b16 %v237
  %v270 = vunpack.c.l.b16 %v238
  %v271 = vunpack.c.l.b16 %v239
  %v272 = vunpack.c.l.b16 %v240
  %v273 = vunpack.c.l.b16 %v241
  %v274 = vunpack.c.l.b16 %v242
  %v275 = vunpack.c.l.b16 %v243
  %v276 = vunpack.c.l.b16 %v244
  %v277 = vunpack.c.l.b16 %v245
  %v278 = vunpack.c.l.b16 %v246
  %v279 = vunpack.c.l.b16 %v247
  %v280 = vunpack.c.l.b16 %v248
  %v281 = vunpack.c.l.b16 %v249
  %v282 = vunpack.c.l.b16 %v250
  %v283 = vpack.c.b16 %v268, %v267
  %v284 = vpack.c.b16 %v270, %v269
  %v285 = vpack.c.b16 %v272, %v271
  %v286 = vpack.c.b16 %v274, %v273
  %v287 = vpack.c.b16 %v276, %v275
  %v288 = vpack.c.b16 %v278, %v277
  %v289 = vpack.c.b16 %v280, %v279
  %v290 = vpack.c.b16 %v282, %v281
  %299 = vmatprep.subr.bf16.mxu0 0
  %300 = vmatpush1.bf16.msra.mxu0 %v290
  %301 = vmatprep.subr.bf16.mxu0 0
  %302 = vmatpush1.bf16.msra.mxu0 %v289
  %303 = vmatprep.subr.bf16.mxu0 0
  %304 = vmatpush1.bf16.msra.mxu0 %v288
  %305 = vmatprep.subr.bf16.mxu0 0
  %306 = vmatpush1.bf16.msra.mxu0 %v287
  %307 = vmatprep.subr.bf16.mxu0 0
  %308 = vmatpush1.bf16.msra.mxu0 %v286
  %309 = vmatprep.subr.bf16.mxu0 0
  %310 = vmatpush1.bf16.msra.mxu0 %v285
  %311 = vmatprep.subr.bf16.mxu0 0
  %312 = vmatpush1.bf16.msra.mxu0 %v284
  %313 = vmatprep.subr.bf16.mxu0 0
  %314 = vmatpush1.bf16.msra.mxu0 %v283
  %315 = vmatprep.subr.bf16.mxu0 0
  %316 = vmatpush2.bf16.msra.mxu0 0
  %317 = vmatprep.subr.bf16.mxu0 0
  %318 = vmatpush2.bf16.msra.mxu0 0
  %319 = vmatprep.subr.bf16.mxu0 0
  %320 = vmatpush2.bf16.msra.mxu0 0
  %321 = vmatprep.subr.bf16.mxu0 0
  %322 = vmatpush2.bf16.msra.mxu0 0
  %323 = vmatprep.subr.bf16.mxu0 0
  %324 = vmatpush2.bf16.msra.mxu0 0
  %325 = vmatprep.subr.bf16.mxu0 0
  %326 = vmatpush2.bf16.msra.mxu0 0
  %327 = vmatprep.subr.bf16.mxu0 0
  %328 = vmatpush2.bf16.msra.mxu0 0
  %329 = vmatprep.subr.bf16.mxu0 0
  %330 = vmatpush2.bf16.msra.mxu0 0
  %331 = vmatprep.mubr.bf16.mxu0 0
  %332 = vmatmul.mubr.bf16.gmra.mxu0 %v234
  %v333 = vpop.f32.mrf.mxu0
  %v334 = vadd.f32 0.0, %v333
  %v335 = vpop.f32.mrf.mxu0
  %v336 = vpop.f32.mrf.mxu0
  %v337 = vpop.f32.mrf.mxu0
  %338 = vdwg.mxu0
  %v339 = vadd.f32 %v233, %v334
  %v340 = vmul.f32 %v226, %v229
  %v341 = vsub.f32 %v339, %v340
  %v342 = vmul.f32 %v219, %v228
  %v343 = vsub.f32 %v341, %v342
  %v344 = vmul.f32 %v343, 0.01
  %v345 = vadd.f32 %v229, %v344
  %v346 = vmul.f32 %v345, 0.01
  %v347 = vadd.f32 %v228, %v346
  %v348 = vadd.f32 %v230, 1.0
  %vm349 = vcmp.gt.f32.partialorder %v347, %v348
  %v350 = vsel %vm349, 1, 0
  %v351 = vcvt.s32.f32 %v350
  %v352 = vmul.f32 %v230, 0.9
  %v353 = vadd.f32 %v352, %v351
  %354 = vst [vmem:[#allocation3] sm:$0xff] %v351
  %v355 = vadd.f32 %v232, %v351
  %s356 = scalar_lea.vmem [#allocation2], 8
  %v357 = vld [vmem:[%s356] sm:$0xff]
  %v358 = vpack.c.bf16 %v351, %v351
  %v359 = vld [vmem:[%s2] sm:$0xf]
  %v360 = vld [vmem:[%s2 + $0x4] sm:$0xf]
  %v361 = vld [vmem:[%s2 + $0x8] sm:$0xf]
  %v362 = vld [vmem:[%s2 + $0xc] sm:$0xf]
  %v363 = vld [vmem:[%s2 + $0x10] sm:$0xf]
  %v364 = vld [vmem:[%s2 + $0x14] sm:$0xf]
  %v365 = vld [vmem:[%s2 + $0x18] sm:$0xf]
  %v366 = vld [vmem:[%s2 + $0x1c] sm:$0xf]
  %v367 = vld [vmem:[%s2 + $0x20] sm:$0xf]
  %v368 = vld [vmem:[%s2 + $0x24] sm:$0xf]
  %v369 = vld [vmem:[%s2 + $0x28] sm:$0xf]
  %v370 = vld [vmem:[%s2 + $0x2c] sm:$0xf]
  %v371 = vld [vmem:[%s2 + $0x30] sm:$0xf]
  %v372 = vld [vmem:[%s2 + $0x34] sm:$0xf]
  %v373 = vld [vmem:[%s2 + $0x38] sm:$0xf]
  %v374 = vld [vmem:[%s2 + $0x3c] sm:$0xf]
  %v391 = vunpack.c.l.b16 %v359
  %v392 = vunpack.c.l.b16 %v360
  %v393 = vunpack.c.l.b16 %v361
  %v394 = vunpack.c.l.b16 %v362
  %v395 = vunpack.c.l.b16 %v363
  %v396 = vunpack.c.l.b16 %v364
  %v397 = vunpack.c.l.b16 %v365
  %v398 = vunpack.c.l.b16 %v366
  %v399 = vunpack.c.l.b16 %v367
  %v400 = vunpack.c.l.b16 %v368
  %v401 = vunpack.c.l.b16 %v369
  %v402 = vunpack.c.l.b16 %v370
  %v403 = vunpack.c.l.b16 %v371
  %v404 = vunpack.c.l.b16 %v372
  %v405 = vunpack.c.l.b16 %v373
  %v406 = vunpack.c.l.b16 %v374
  %v407 = vpack.c.b16 %v392, %v391
  %v408 = vpack.c.b16 %v394, %v393
  %v409 = vpack.c.b16 %v396, %v395
  %v410 = vpack.c.b16 %v398, %v397
  %v411 = vpack.c.b16 %v400, %v399
  %v412 = vpack.c.b16 %v402, %v401
  %v413 = vpack.c.b16 %v404, %v403
  %v414 = vpack.c.b16 %v406, %v405
  %423 = vmatprep.subr.bf16.mxu0 0
  %424 = vmatpush1.bf16.msra.mxu0 %v414
  %425 = vmatprep.subr.bf16.mxu0 0
  %426 = vmatpush1.bf16.msra.mxu0 %v413
  %427 = vmatprep.subr.bf16.mxu0 0
  %428 = vmatpush1.bf16.msra.mxu0 %v412
  %429 = vmatprep.subr.bf16.mxu0 0
  %430 = vmatpush1.bf16.msra.mxu0 %v411
  %431 = vmatprep.subr.bf16.mxu0 0
  %432 = vmatpush1.bf16.msra.mxu0 %v410
  %433 = vmatprep.subr.bf16.mxu0 0
  %434 = vmatpush1.bf16.msra.mxu0 %v409
  %435 = vmatprep.subr.bf16.mxu0 0
  %436 = vmatpush1.bf16.msra.mxu0 %v408
  %437 = vmatprep.subr.bf16.mxu0 0
  %438 = vmatpush1.bf16.msra.mxu0 %v407
  %439 = vmatprep.subr.bf16.mxu0 0
  %440 = vmatpush2.bf16.msra.mxu0 0
  %441 = vmatprep.subr.bf16.mxu0 0
  %442 = vmatpush2.bf16.msra.mxu0 0
  %443 = vmatprep.subr.bf16.mxu0 0
  %444 = vmatpush2.bf16.msra.mxu0 0
  %445 = vmatprep.subr.bf16.mxu0 0
  %446 = vmatpush2.bf16.msra.mxu0 0
  %447 = vmatprep.subr.bf16.mxu0 0
  %448 = vmatpush2.bf16.msra.mxu0 0
  %449 = vmatprep.subr.bf16.mxu0 0
  %450 = vmatpush2.bf16.msra.mxu0 0
  %451 = vmatprep.subr.bf16.mxu0 0
  %452 = vmatpush2.bf16.msra.mxu0 0
  %453 = vmatprep.subr.bf16.mxu0 0
  %454 = vmatpush2.bf16.msra.mxu0 0
  %455 = vmatprep.mubr.bf16.mxu0 0
  %456 = vmatmul.mubr.bf16.gmra.mxu0 %v358
  %v457 = vpop.f32.mrf.mxu0
  %v458 = vadd.f32 0.0, %v457
  %v459 = vpop.f32.mrf.mxu0
  %v460 = vpop.f32.mrf.mxu0
  %v461 = vpop.f32.mrf.mxu0
  %462 = vdwg.mxu0
  %v463 = vadd.f32 %v357, %v458
  %v464 = vmul.f32 %v226, %v345
  %v465 = vsub.f32 %v463, %v464
  %v466 = vmul.f32 %v219, %v347
  %v467 = vsub.f32 %v465, %v466
  %v468 = vmul.f32 %v467, 0.01
  %v469 = vadd.f32 %v345, %v468
  %v470 = vmul.f32 %v469, 0.01
  %v471 = vadd.f32 %v347, %v470
  %v472 = vadd.f32 %v353, 1.0
  %vm473 = vcmp.gt.f32.partialorder %v471, %v472
  %v474 = vsel %vm473, 1, 0
  %v475 = vcvt.s32.f32 %v474
  %v476 = vmul.f32 %v353, 0.9
  %v477 = vadd.f32 %v476, %v475
  %s478 = scalar_lea.vmem [#allocation3], 8
  %479 = vst [vmem:[%s478] sm:$0xff] %v475
  %v480 = vadd.f32 %v355, %v475
  %s481 = scalar_lea.vmem [#allocation2], 16
  %v482 = vld [vmem:[%s481] sm:$0xff]
  %v483 = vpack.c.bf16 %v475, %v475
  %v484 = vld [vmem:[%s2] sm:$0xf]
  %v485 = vld [vmem:[%s2 + $0x4] sm:$0xf]
  %v486 = vld [vmem:[%s2 + $0x8] sm:$0xf]
  %v487 = vld [vmem:[%s2 + $0xc] sm:$0xf]
  %v488 = vld [vmem:[%s2 + $0x10] sm:$0xf]
  %v489 = vld [vmem:[%s2 + $0x14] sm:$0xf]
  %v490 = vld [vmem:[%s2 + $0x18] sm:$0xf]
  %v491 = vld [vmem:[%s2 + $0x1c] sm:$0xf]
  %v492 = vld [vmem:[%s2 + $0x20] sm:$0xf]
  %v493 = vld [vmem:[%s2 + $0x24] sm:$0xf]
  %v494 = vld [vmem:[%s2 + $0x28] sm:$0xf]
  %v495 = vld [vmem:[%s2 + $0x2c] sm:$0xf]
  %v496 = vld [vmem:[%s2 + $0x30] sm:$0xf]
  %v497 = vld [vmem:[%s2 + $0x34] sm:$0xf]
  %v498 = vld [vmem:[%s2 + $0x38] sm:$0xf]
  %v499 = vld [vmem:[%s2 + $0x3c] sm:$0xf]
  %v516 = vunpack.c.l.b16 %v484
  %v517 = vunpack.c.l.b16 %v485
  %v518 = vunpack.c.l.b16 %v486
  %v519 = vunpack.c.l.b16 %v487
  %v520 = vunpack.c.l.b16 %v488
  %v521 = vunpack.c.l.b16 %v489
  %v522 = vunpack.c.l.b16 %v490
  %v523 = vunpack.c.l.b16 %v491
  %v524 = vunpack.c.l.b16 %v492
  %v525 = vunpack.c.l.b16 %v493
  %v526 = vunpack.c.l.b16 %v494
  %v527 = vunpack.c.l.b16 %v495
  %v528 = vunpack.c.l.b16 %v496
  %v529 = vunpack.c.l.b16 %v497
  %v530 = vunpack.c.l.b16 %v498
  %v531 = vunpack.c.l.b16 %v499
  %v532 = vpack.c.b16 %v517, %v516
  %v533 = vpack.c.b16 %v519, %v518
  %v534 = vpack.c.b16 %v521, %v520
  %v535 = vpack.c.b16 %v523, %v522
  %v536 = vpack.c.b16 %v525, %v524
  %v537 = vpack.c.b16 %v527, %v526
  %v538 = vpack.c.b16 %v529, %v528
  %v539 = vpack.c.b16 %v531, %v530
  %548 = vmatprep.subr.bf16.mxu0 0
  %549 = vmatpush1.bf16.msra.mxu0 %v539
  %550 = vmatprep.subr.bf16.mxu0 0
  %551 = vmatpush1.bf16.msra.mxu0 %v538
  %552 = vmatprep.subr.bf16.mxu0 0
  %553 = vmatpush1.bf16.msra.mxu0 %v537
  %554 = vmatprep.subr.bf16.mxu0 0
  %555 = vmatpush1.bf16.msra.mxu0 %v536
  %556 = vmatprep.subr.bf16.mxu0 0
  %557 = vmatpush1.bf16.msra.mxu0 %v535
  %558 = vmatprep.subr.bf16.mxu0 0
  %559 = vmatpush1.bf16.msra.mxu0 %v534
  %560 = vmatprep.subr.bf16.mxu0 0
  %561 = vmatpush1.bf16.msra.mxu0 %v533
  %562 = vmatprep.subr.bf16.mxu0 0
  %563 = vmatpush1.bf16.msra.mxu0 %v532
  %564 = vmatprep.subr.bf16.mxu0 0
  %565 = vmatpush2.bf16.msra.mxu0 0
  %566 = vmatprep.subr.bf16.mxu0 0
  %567 = vmatpush2.bf16.msra.mxu0 0
  %568 = vmatprep.subr.bf16.mxu0 0
  %569 = vmatpush2.bf16.msra.mxu0 0
  %570 = vmatprep.subr.bf16.mxu0 0
  %571 = vmatpush2.bf16.msra.mxu0 0
  %572 = vmatprep.subr.bf16.mxu0 0
  %573 = vmatpush2.bf16.msra.mxu0 0
  %574 = vmatprep.subr.bf16.mxu0 0
  %575 = vmatpush2.bf16.msra.mxu0 0
  %576 = vmatprep.subr.bf16.mxu0 0
  %577 = vmatpush2.bf16.msra.mxu0 0
  %578 = vmatprep.subr.bf16.mxu0 0
  %579 = vmatpush2.bf16.msra.mxu0 0
  %580 = vmatprep.mubr.bf16.mxu0 0
  %581 = vmatmul.mubr.bf16.gmra.mxu0 %v483
  %v582 = vpop.f32.mrf.mxu0
  %v583 = vadd.f32 0.0, %v582
  %v584 = vpop.f32.mrf.mxu0
  %v585 = vpop.f32.mrf.mxu0
  %v586 = vpop.f32.mrf.mxu0
  %587 = vdwg.mxu0
  %v588 = vadd.f32 %v482, %v583
  %v589 = vmul.f32 %v226, %v469
  %v590 = vsub.f32 %v588, %v589
  %v591 = vmul.f32 %v219, %v471
  %v592 = vsub.f32 %v590, %v591
  %v593 = vmul.f32 %v592, 0.01
  %v594 = vadd.f32 %v469, %v593
  %v595 = vmul.f32 %v594, 0.01
  %v596 = vadd.f32 %v471, %v595
  %v597 = vadd.f32 %v477, 1.0
  %vm598 = vcmp.gt.f32.partialorder %v596, %v597
  %v599 = vsel %vm598, 1, 0
  %v600 = vcvt.s32.f32 %v599
  %v601 = vmul.f32 %v477, 0.9
  %v602 = vadd.f32 %v601, %v600
  %s603 = scalar_lea.vmem [#allocation3], 16
  %604 = vst [vmem:[%s603] sm:$0xff] %v600
  %v605 = vadd.f32 %v480, %v600
  %s606 = scalar_lea.vmem [#allocation2], 24
  %v607 = vld [vmem:[%s606] sm:$0xff]
  %v608 = vpack.c.bf16 %v600, %v600
  %v609 = vld [vmem:[%s2] sm:$0xf]
  %v610 = vld [vmem:[%s2 + $0x4] sm:$0xf]
  %v611 = vld [vmem:[%s2 + $0x8] sm:$0xf]
  %v612 = vld [vmem:[%s2 + $0xc] sm:$0xf]
  %v613 = vld [vmem:[%s2 + $0x10] sm:$0xf]
  %v614 = vld [vmem:[%s2 + $0x14] sm:$0xf]
  %v615 = vld [vmem:[%s2 + $0x18] sm:$0xf]
  %v616 = vld [vmem:[%s2 + $0x1c] sm:$0xf]
  %v617 = vld [vmem:[%s2 + $0x20] sm:$0xf]
  %v618 = vld [vmem:[%s2 + $0x24] sm:$0xf]
  %v619 = vld [vmem:[%s2 + $0x28] sm:$0xf]
  %v620 = vld [vmem:[%s2 + $0x2c] sm:$0xf]
  %v621 = vld [vmem:[%s2 + $0x30] sm:$0xf]
  %v622 = vld [vmem:[%s2 + $0x34] sm:$0xf]
  %v623 = vld [vmem:[%s2 + $0x38] sm:$0xf]
  %v624 = vld [vmem:[%s2 + $0x3c] sm:$0xf]
  %v641 = vunpack.c.l.b16 %v609
  %v642 = vunpack.c.l.b16 %v610
  %v643 = vunpack.c.l.b16 %v611
  %v644 = vunpack.c.l.b16 %v612
  %v645 = vunpack.c.l.b16 %v613
  %v646 = vunpack.c.l.b16 %v614
  %v647 = vunpack.c.l.b16 %v615
  %v648 = vunpack.c.l.b16 %v616
  %v649 = vunpack.c.l.b16 %v617
  %v650 = vunpack.c.l.b16 %v618
  %v651 = vunpack.c.l.b16 %v619
  %v652 = vunpack.c.l.b16 %v620
  %v653 = vunpack.c.l.b16 %v621
  %v654 = vunpack.c.l.b16 %v622
  %v655 = vunpack.c.l.b16 %v623
  %v656 = vunpack.c.l.b16 %v624
  %v657 = vpack.c.b16 %v642, %v641
  %v658 = vpack.c.b16 %v644, %v643
  %v659 = vpack.c.b16 %v646, %v645
  %v660 = vpack.c.b16 %v648, %v647
  %v661 = vpack.c.b16 %v650, %v649
  %v662 = vpack.c.b16 %v652, %v651
  %v663 = vpack.c.b16 %v654, %v653
  %v664 = vpack.c.b16 %v656, %v655
  %673 = vmatprep.subr.bf16.mxu0 0
  %674 = vmatpush1.bf16.msra.mxu0 %v664
  %675 = vmatprep.subr.bf16.mxu0 0
  %676 = vmatpush1.bf16.msra.mxu0 %v663
  %677 = vmatprep.subr.bf16.mxu0 0
  %678 = vmatpush1.bf16.msra.mxu0 %v662
  %679 = vmatprep.subr.bf16.mxu0 0
  %680 = vmatpush1.bf16.msra.mxu0 %v661
  %681 = vmatprep.subr.bf16.mxu0 0
  %682 = vmatpush1.bf16.msra.mxu0 %v660
  %683 = vmatprep.subr.bf16.mxu0 0
  %684 = vmatpush1.bf16.msra.mxu0 %v659
  %685 = vmatprep.subr.bf16.mxu0 0
  %686 = vmatpush1.bf16.msra.mxu0 %v658
  %687 = vmatprep.subr.bf16.mxu0 0
  %688 = vmatpush1.bf16.msra.mxu0 %v657
  %689 = vmatprep.subr.bf16.mxu0 0
  %690 = vmatpush2.bf16.msra.mxu0 0
  %691 = vmatprep.subr.bf16.mxu0 0
  %692 = vmatpush2.bf16.msra.mxu0 0
  %693 = vmatprep.subr.bf16.mxu0 0
  %694 = vmatpush2.bf16.msra.mxu0 0
  %695 = vmatprep.subr.bf16.mxu0 0
  %696 = vmatpush2.bf16.msra.mxu0 0
  %697 = vmatprep.subr.bf16.mxu0 0
  %698 = vmatpush2.bf16.msra.mxu0 0
  %699 = vmatprep.subr.bf16.mxu0 0
  %700 = vmatpush2.bf16.msra.mxu0 0
  %701 = vmatprep.subr.bf16.mxu0 0
  %702 = vmatpush2.bf16.msra.mxu0 0
  %703 = vmatprep.subr.bf16.mxu0 0
  %704 = vmatpush2.bf16.msra.mxu0 0
  %705 = vmatprep.mubr.bf16.mxu0 0
  %706 = vmatmul.mubr.bf16.gmra.mxu0 %v608
  %v707 = vpop.f32.mrf.mxu0
  %v708 = vadd.f32 0.0, %v707
  %v709 = vpop.f32.mrf.mxu0
  %v710 = vpop.f32.mrf.mxu0
  %v711 = vpop.f32.mrf.mxu0
  %712 = vdwg.mxu0
  %v713 = vadd.f32 %v607, %v708
  %v714 = vmul.f32 %v226, %v594
  %v715 = vsub.f32 %v713, %v714
  %v716 = vmul.f32 %v219, %v596
  %v717 = vsub.f32 %v715, %v716
  %v718 = vmul.f32 %v717, 0.01
  %v719 = vadd.f32 %v594, %v718
  %v720 = vmul.f32 %v719, 0.01
  %v721 = vadd.f32 %v596, %v720
  %v722 = vadd.f32 %v602, 1.0
  %vm723 = vcmp.gt.f32.partialorder %v721, %v722
  %v724 = vsel %vm723, 1, 0
  %v725 = vcvt.s32.f32 %v724
  %v726 = vmul.f32 %v602, 0.9
  %v727 = vadd.f32 %v726, %v725
  %s728 = scalar_lea.vmem [#allocation3], 24
  %729 = vst [vmem:[%s728] sm:$0xff] %v725
  %v730 = vadd.f32 %v605, %v725
  %s731 = scalar_lea.vmem [#allocation2], 32
  %v732 = vld [vmem:[%s731] sm:$0xff]
  %v733 = vpack.c.bf16 %v725, %v725
  %v734 = vld [vmem:[%s2] sm:$0xf]
  %v735 = vld [vmem:[%s2 + $0x4] sm:$0xf]
  %v736 = vld [vmem:[%s2 + $0x8] sm:$0xf]
  %v737 = vld [vmem:[%s2 + $0xc] sm:$0xf]
  %v738 = vld [vmem:[%s2 + $0x10] sm:$0xf]
  %v739 = vld [vmem:[%s2 + $0x14] sm:$0xf]
  %v740 = vld [vmem:[%s2 + $0x18] sm:$0xf]
  %v741 = vld [vmem:[%s2 + $0x1c] sm:$0xf]
  %v742 = vld [vmem:[%s2 + $0x20] sm:$0xf]
  %v743 = vld [vmem:[%s2 + $0x24] sm:$0xf]
  %v744 = vld [vmem:[%s2 + $0x28] sm:$0xf]
  %v745 = vld [vmem:[%s2 + $0x2c] sm:$0xf]
  %v746 = vld [vmem:[%s2 + $0x30] sm:$0xf]
  %v747 = vld [vmem:[%s2 + $0x34] sm:$0xf]
  %v748 = vld [vmem:[%s2 + $0x38] sm:$0xf]
  %v749 = vld [vmem:[%s2 + $0x3c] sm:$0xf]
  %v766 = vunpack.c.l.b16 %v734
  %v767 = vunpack.c.l.b16 %v735
  %v768 = vunpack.c.l.b16 %v736
  %v769 = vunpack.c.l.b16 %v737
  %v770 = vunpack.c.l.b16 %v738
  %v771 = vunpack.c.l.b16 %v739
  %v772 = vunpack.c.l.b16 %v740
  %v773 = vunpack.c.l.b16 %v741
  %v774 = vunpack.c.l.b16 %v742
  %v775 = vunpack.c.l.b16 %v743
  %v776 = vunpack.c.l.b16 %v744
  %v777 = vunpack.c.l.b16 %v745
  %v778 = vunpack.c.l.b16 %v746
  %v779 = vunpack.c.l.b16 %v747
  %v780 = vunpack.c.l.b16 %v748
  %v781 = vunpack.c.l.b16 %v749
  %v782 = vpack.c.b16 %v767, %v766
  %v783 = vpack.c.b16 %v769, %v768
  %v784 = vpack.c.b16 %v771, %v770
  %v785 = vpack.c.b16 %v773, %v772
  %v786 = vpack.c.b16 %v775, %v774
  %v787 = vpack.c.b16 %v777, %v776
  %v788 = vpack.c.b16 %v779, %v778
  %v789 = vpack.c.b16 %v781, %v780
  %798 = vmatprep.subr.bf16.mxu0 0
  %799 = vmatpush1.bf16.msra.mxu0 %v789
  %800 = vmatprep.subr.bf16.mxu0 0
  %801 = vmatpush1.bf16.msra.mxu0 %v788
  %802 = vmatprep.subr.bf16.mxu0 0
  %803 = vmatpush1.bf16.msra.mxu0 %v787
  %804 = vmatprep.subr.bf16.mxu0 0
  %805 = vmatpush1.bf16.msra.mxu0 %v786
  %806 = vmatprep.subr.bf16.mxu0 0
  %807 = vmatpush1.bf16.msra.mxu0 %v785
  %808 = vmatprep.subr.bf16.mxu0 0
  %809 = vmatpush1.bf16.msra.mxu0 %v784
  %810 = vmatprep.subr.bf16.mxu0 0
  %811 = vmatpush1.bf16.msra.mxu0 %v783
  %812 = vmatprep.subr.bf16.mxu0 0
  %813 = vmatpush1.bf16.msra.mxu0 %v782
  %814 = vmatprep.subr.bf16.mxu0 0
  %815 = vmatpush2.bf16.msra.mxu0 0
  %816 = vmatprep.subr.bf16.mxu0 0
  %817 = vmatpush2.bf16.msra.mxu0 0
  %818 = vmatprep.subr.bf16.mxu0 0
  %819 = vmatpush2.bf16.msra.mxu0 0
  %820 = vmatprep.subr.bf16.mxu0 0
  %821 = vmatpush2.bf16.msra.mxu0 0
  %822 = vmatprep.subr.bf16.mxu0 0
  %823 = vmatpush2.bf16.msra.mxu0 0
  %824 = vmatprep.subr.bf16.mxu0 0
  %825 = vmatpush2.bf16.msra.mxu0 0
  %826 = vmatprep.subr.bf16.mxu0 0
  %827 = vmatpush2.bf16.msra.mxu0 0
  %828 = vmatprep.subr.bf16.mxu0 0
  %829 = vmatpush2.bf16.msra.mxu0 0
  %830 = vmatprep.mubr.bf16.mxu0 0
  %831 = vmatmul.mubr.bf16.gmra.mxu0 %v733
  %v832 = vpop.f32.mrf.mxu0
  %v833 = vadd.f32 0.0, %v832
  %v834 = vpop.f32.mrf.mxu0
  %v835 = vpop.f32.mrf.mxu0
  %v836 = vpop.f32.mrf.mxu0
  %837 = vdwg.mxu0
  %v838 = vadd.f32 %v732, %v833
  %v839 = vmul.f32 %v226, %v719
  %v840 = vsub.f32 %v838, %v839
  %v841 = vmul.f32 %v219, %v721
  %v842 = vsub.f32 %v840, %v841
  %v843 = vmul.f32 %v842, 0.01
  %v844 = vadd.f32 %v719, %v843
  %v845 = vmul.f32 %v844, 0.01
  %v846 = vadd.f32 %v721, %v845
  %v847 = vadd.f32 %v727, 1.0
  %vm848 = vcmp.gt.f32.partialorder %v846, %v847
  %v849 = vsel %vm848, 1, 0
  %v850 = vcvt.s32.f32 %v849
  %v851 = vmul.f32 %v727, 0.9
  %v852 = vadd.f32 %v851, %v850
  %s853 = scalar_lea.vmem [#allocation3], 32
  %854 = vst [vmem:[%s853] sm:$0xff] %v850
  %v855 = vadd.f32 %v730, %v850
  %s856 = scalar_lea.vmem [#allocation2], 40
  %v857 = vld [vmem:[%s856] sm:$0xff]
  %v858 = vpack.c.bf16 %v850, %v850
  %v859 = vld [vmem:[%s2] sm:$0xf]
  %v860 = vld [vmem:[%s2 + $0x4] sm:$0xf]
  %v861 = vld [vmem:[%s2 + $0x8] sm:$0xf]
  %v862 = vld [vmem:[%s2 + $0xc] sm:$0xf]
  %v863 = vld [vmem:[%s2 + $0x10] sm:$0xf]
  %v864 = vld [vmem:[%s2 + $0x14] sm:$0xf]
  %v865 = vld [vmem:[%s2 + $0x18] sm:$0xf]
  %v866 = vld [vmem:[%s2 + $0x1c] sm:$0xf]
  %v867 = vld [vmem:[%s2 + $0x20] sm:$0xf]
  %v868 = vld [vmem:[%s2 + $0x24] sm:$0xf]
  %v869 = vld [vmem:[%s2 + $0x28] sm:$0xf]
  %v870 = vld [vmem:[%s2 + $0x2c] sm:$0xf]
  %v871 = vld [vmem:[%s2 + $0x30] sm:$0xf]
  %v872 = vld [vmem:[%s2 + $0x34] sm:$0xf]
  %v873 = vld [vmem:[%s2 + $0x38] sm:$0xf]
  %v874 = vld [vmem:[%s2 + $0x3c] sm:$0xf]
  %v891 = vunpack.c.l.b16 %v859
  %v892 = vunpack.c.l.b16 %v860
  %v893 = vunpack.c.l.b16 %v861
  %v894 = vunpack.c.l.b16 %v862
  %v895 = vunpack.c.l.b16 %v863
  %v896 = vunpack.c.l.b16 %v864
  %v897 = vunpack.c.l.b16 %v865
  %v898 = vunpack.c.l.b16 %v866
  %v899 = vunpack.c.l.b16 %v867
  %v900 = vunpack.c.l.b16 %v868
  %v901 = vunpack.c.l.b16 %v869
  %v902 = vunpack.c.l.b16 %v870
  %v903 = vunpack.c.l.b16 %v871
  %v904 = vunpack.c.l.b16 %v872
  %v905 = vunpack.c.l.b16 %v873
  %v906 = vunpack.c.l.b16 %v874
  %v907 = vpack.c.b16 %v892, %v891
  %v908 = vpack.c.b16 %v894, %v893
  %v909 = vpack.c.b16 %v896, %v895
  %v910 = vpack.c.b16 %v898, %v897
  %v911 = vpack.c.b16 %v900, %v899
  %v912 = vpack.c.b16 %v902, %v901
  %v913 = vpack.c.b16 %v904, %v903
  %v914 = vpack.c.b16 %v906, %v905
  %923 = vmatprep.subr.bf16.mxu0 0
  %924 = vmatpush1.bf16.msra.mxu0 %v914
  %925 = vmatprep.subr.bf16.mxu0 0
  %926 = vmatpush1.bf16.msra.mxu0 %v913
  %927 = vmatprep.subr.bf16.mxu0 0
  %928 = vmatpush1.bf16.msra.mxu0 %v912
  %929 = vmatprep.subr.bf16.mxu0 0
  %930 = vmatpush1.bf16.msra.mxu0 %v911
  %931 = vmatprep.subr.bf16.mxu0 0
  %932 = vmatpush1.bf16.msra.mxu0 %v910
  %933 = vmatprep.subr.bf16.mxu0 0
  %934 = vmatpush1.bf16.msra.mxu0 %v909
  %935 = vmatprep.subr.bf16.mxu0 0
  %936 = vmatpush1.bf16.msra.mxu0 %v908
  %937 = vmatprep.subr.bf16.mxu0 0
  %938 = vmatpush1.bf16.msra.mxu0 %v907
  %939 = vmatprep.subr.bf16.mxu0 0
  %940 = vmatpush2.bf16.msra.mxu0 0
  %941 = vmatprep.subr.bf16.mxu0 0
  %942 = vmatpush2.bf16.msra.mxu0 0
  %943 = vmatprep.subr.bf16.mxu0 0
  %944 = vmatpush2.bf16.msra.mxu0 0
  %945 = vmatprep.subr.bf16.mxu0 0
  %946 = vmatpush2.bf16.msra.mxu0 0
  %947 = vmatprep.subr.bf16.mxu0 0
  %948 = vmatpush2.bf16.msra.mxu0 0
  %949 = vmatprep.subr.bf16.mxu0 0
  %950 = vmatpush2.bf16.msra.mxu0 0
  %951 = vmatprep.subr.bf16.mxu0 0
  %952 = vmatpush2.bf16.msra.mxu0 0
  %953 = vmatprep.subr.bf16.mxu0 0
  %954 = vmatpush2.bf16.msra.mxu0 0
  %955 = vmatprep.mubr.bf16.mxu0 0
  %956 = vmatmul.mubr.bf16.gmra.mxu0 %v858
  %v957 = vpop.f32.mrf.mxu0
  %v958 = vadd.f32 0.0, %v957
  %v959 = vpop.f32.mrf.mxu0
  %v960 = vpop.f32.mrf.mxu0
  %v961 = vpop.f32.mrf.mxu0
  %962 = vdwg.mxu0
  %v963 = vadd.f32 %v857, %v958
  %v964 = vmul.f32 %v226, %v844
  %v965 = vsub.f32 %v963, %v964
  %v966 = vmul.f32 %v219, %v846
  %v967 = vsub.f32 %v965, %v966
  %v968 = vmul.f32 %v967, 0.01
  %v969 = vadd.f32 %v844, %v968
  %v970 = vmul.f32 %v969, 0.01
  %v971 = vadd.f32 %v846, %v970
  %v972 = vadd.f32 %v852, 1.0
  %vm973 = vcmp.gt.f32.partialorder %v971, %v972
  %v974 = vsel %vm973, 1, 0
  %v975 = vcvt.s32.f32 %v974
  %v976 = vmul.f32 %v852, 0.9
  %v977 = vadd.f32 %v976, %v975
  %s978 = scalar_lea.vmem [#allocation3], 40
  %979 = vst [vmem:[%s978] sm:$0xff] %v975
  %v980 = vadd.f32 %v855, %v975
  %s981 = scalar_lea.vmem [#allocation2], 48
  %v982 = vld [vmem:[%s981] sm:$0xff]
  %v983 = vpack.c.bf16 %v975, %v975
  %v984 = vld [vmem:[%s2] sm:$0xf]
  %v985 = vld [vmem:[%s2 + $0x4] sm:$0xf]
  %v986 = vld [vmem:[%s2 + $0x8] sm:$0xf]
  %v987 = vld [vmem:[%s2 + $0xc] sm:$0xf]
  %v988 = vld [vmem:[%s2 + $0x10] sm:$0xf]
  %v989 = vld [vmem:[%s2 + $0x14] sm:$0xf]
  %v990 = vld [vmem:[%s2 + $0x18] sm:$0xf]
  %v991 = vld [vmem:[%s2 + $0x1c] sm:$0xf]
  %v992 = vld [vmem:[%s2 + $0x20] sm:$0xf]
  %v993 = vld [vmem:[%s2 + $0x24] sm:$0xf]
  %v994 = vld [vmem:[%s2 + $0x28] sm:$0xf]
  %v995 = vld [vmem:[%s2 + $0x2c] sm:$0xf]
  %v996 = vld [vmem:[%s2 + $0x30] sm:$0xf]
  %v997 = vld [vmem:[%s2 + $0x34] sm:$0xf]
  %v998 = vld [vmem:[%s2 + $0x38] sm:$0xf]
  %v999 = vld [vmem:[%s2 + $0x3c] sm:$0xf]
  %v1016 = vunpack.c.l.b16 %v984
  %v1017 = vunpack.c.l.b16 %v985
  %v1018 = vunpack.c.l.b16 %v986
  %v1019 = vunpack.c.l.b16 %v987
  %v1020 = vunpack.c.l.b16 %v988
  %v1021 = vunpack.c.l.b16 %v989
  %v1022 = vunpack.c.l.b16 %v990
  %v1023 = vunpack.c.l.b16 %v991
  %v1024 = vunpack.c.l.b16 %v992
  %v1025 = vunpack.c.l.b16 %v993
  %v1026 = vunpack.c.l.b16 %v994
  %v1027 = vunpack.c.l.b16 %v995
  %v1028 = vunpack.c.l.b16 %v996
  %v1029 = vunpack.c.l.b16 %v997
  %v1030 = vunpack.c.l.b16 %v998
  %v1031 = vunpack.c.l.b16 %v999
  %v1032 = vpack.c.b16 %v1017, %v1016
  %v1033 = vpack.c.b16 %v1019, %v1018
  %v1034 = vpack.c.b16 %v1021, %v1020
  %v1035 = vpack.c.b16 %v1023, %v1022
  %v1036 = vpack.c.b16 %v1025, %v1024
  %v1037 = vpack.c.b16 %v1027, %v1026
  %v1038 = vpack.c.b16 %v1029, %v1028
  %v1039 = vpack.c.b16 %v1031, %v1030
  %1048 = vmatprep.subr.bf16.mxu0 0
  %1049 = vmatpush1.bf16.msra.mxu0 %v1039
  %1050 = vmatprep.subr.bf16.mxu0 0
  %1051 = vmatpush1.bf16.msra.mxu0 %v1038
  %1052 = vmatprep.subr.bf16.mxu0 0
  %1053 = vmatpush1.bf16.msra.mxu0 %v1037
  %1054 = vmatprep.subr.bf16.mxu0 0
  %1055 = vmatpush1.bf16.msra.mxu0 %v1036
  %1056 = vmatprep.subr.bf16.mxu0 0
  %1057 = vmatpush1.bf16.msra.mxu0 %v1035
  %1058 = vmatprep.subr.bf16.mxu0 0
  %1059 = vmatpush1.bf16.msra.mxu0 %v1034
  %1060 = vmatprep.subr.bf16.mxu0 0
  %1061 = vmatpush1.bf16.msra.mxu0 %v1033
  %1062 = vmatprep.subr.bf16.mxu0 0
  %1063 = vmatpush1.bf16.msra.mxu0 %v1032
  %1064 = vmatprep.subr.bf16.mxu0 0
  %1065 = vmatpush2.bf16.msra.mxu0 0
  %1066 = vmatprep.subr.bf16.mxu0 0
  %1067 = vmatpush2.bf16.msra.mxu0 0
  %1068 = vmatprep.subr.bf16.mxu0 0
  %1069 = vmatpush2.bf16.msra.mxu0 0
  %1070 = vmatprep.subr.bf16.mxu0 0
  %1071 = vmatpush2.bf16.msra.mxu0 0
  %1072 = vmatprep.subr.bf16.mxu0 0
  %1073 = vmatpush2.bf16.msra.mxu0 0
  %1074 = vmatprep.subr.bf16.mxu0 0
  %1075 = vmatpush2.bf16.msra.mxu0 0
  %1076 = vmatprep.subr.bf16.mxu0 0
  %1077 = vmatpush2.bf16.msra.mxu0 0
  %1078 = vmatprep.subr.bf16.mxu0 0
  %1079 = vmatpush2.bf16.msra.mxu0 0
  %1080 = vmatprep.mubr.bf16.mxu0 0
  %1081 = vmatmul.mubr.bf16.gmra.mxu0 %v983
  %v1082 = vpop.f32.mrf.mxu0
  %v1083 = vadd.f32 0.0, %v1082
  %v1084 = vpop.f32.mrf.mxu0
  %v1085 = vpop.f32.mrf.mxu0
  %v1086 = vpop.f32.mrf.mxu0
  %1087 = vdwg.mxu0
  %v1088 = vadd.f32 %v982, %v1083
  %v1089 = vmul.f32 %v226, %v969
  %v1090 = vsub.f32 %v1088, %v1089
  %v1091 = vmul.f32 %v219, %v971
  %v1092 = vsub.f32 %v1090, %v1091
  %v1093 = vmul.f32 %v1092, 0.01
  %v1094 = vadd.f32 %v969, %v1093
  %v1095 = vmul.f32 %v1094, 0.01
  %v1096 = vadd.f32 %v971, %v1095
  %v1097 = vadd.f32 %v977, 1.0
  %vm1098 = vcmp.gt.f32.partialorder %v1096, %v1097
  %v1099 = vsel %vm1098, 1, 0
  %v1100 = vcvt.s32.f32 %v1099
  %v1101 = vmul.f32 %v977, 0.9
  %v1102 = vadd.f32 %v1101, %v1100
  %s1103 = scalar_lea.vmem [#allocation3], 48
  %1104 = vst [vmem:[%s1103] sm:$0xff] %v1100
  %v1105 = vadd.f32 %v980, %v1100
  %s1106 = scalar_lea.vmem [#allocation2], 56
  %v1107 = vld [vmem:[%s1106] sm:$0xff]
  %v1108 = vpack.c.bf16 %v1100, %v1100
  %v1109 = vld [vmem:[%s2] sm:$0xf]
  %v1110 = vld [vmem:[%s2 + $0x4] sm:$0xf]
  %v1111 = vld [vmem:[%s2 + $0x8] sm:$0xf]
  %v1112 = vld [vmem:[%s2 + $0xc] sm:$0xf]
  %v1113 = vld [vmem:[%s2 + $0x10] sm:$0xf]
  %v1114 = vld [vmem:[%s2 + $0x14] sm:$0xf]
  %v1115 = vld [vmem:[%s2 + $0x18] sm:$0xf]
  %v1116 = vld [vmem:[%s2 + $0x1c] sm:$0xf]
  %v1117 = vld [vmem:[%s2 + $0x20] sm:$0xf]
  %v1118 = vld [vmem:[%s2 + $0x24] sm:$0xf]
  %v1119 = vld [vmem:[%s2 + $0x28] sm:$0xf]
  %v1120 = vld [vmem:[%s2 + $0x2c] sm:$0xf]
  %v1121 = vld [vmem:[%s2 + $0x30] sm:$0xf]
  %v1122 = vld [vmem:[%s2 + $0x34] sm:$0xf]
  %v1123 = vld [vmem:[%s2 + $0x38] sm:$0xf]
  %v1124 = vld [vmem:[%s2 + $0x3c] sm:$0xf]
  %v1141 = vunpack.c.l.b16 %v1109
  %v1142 = vunpack.c.l.b16 %v1110
  %v1143 = vunpack.c.l.b16 %v1111
  %v1144 = vunpack.c.l.b16 %v1112
  %v1145 = vunpack.c.l.b16 %v1113
  %v1146 = vunpack.c.l.b16 %v1114
  %v1147 = vunpack.c.l.b16 %v1115
  %v1148 = vunpack.c.l.b16 %v1116
  %v1149 = vunpack.c.l.b16 %v1117
  %v1150 = vunpack.c.l.b16 %v1118
  %v1151 = vunpack.c.l.b16 %v1119
  %v1152 = vunpack.c.l.b16 %v1120
  %v1153 = vunpack.c.l.b16 %v1121
  %v1154 = vunpack.c.l.b16 %v1122
  %v1155 = vunpack.c.l.b16 %v1123
  %v1156 = vunpack.c.l.b16 %v1124
  %v1157 = vpack.c.b16 %v1142, %v1141
  %v1158 = vpack.c.b16 %v1144, %v1143
  %v1159 = vpack.c.b16 %v1146, %v1145
  %v1160 = vpack.c.b16 %v1148, %v1147
  %v1161 = vpack.c.b16 %v1150, %v1149
  %v1162 = vpack.c.b16 %v1152, %v1151
  %v1163 = vpack.c.b16 %v1154, %v1153
  %v1164 = vpack.c.b16 %v1156, %v1155
  %1173 = vmatprep.subr.bf16.mxu0 0
  %1174 = vmatpush1.bf16.msra.mxu0 %v1164
  %1175 = vmatprep.subr.bf16.mxu0 0
  %1176 = vmatpush1.bf16.msra.mxu0 %v1163
  %1177 = vmatprep.subr.bf16.mxu0 0
  %1178 = vmatpush1.bf16.msra.mxu0 %v1162
  %1179 = vmatprep.subr.bf16.mxu0 0
  %1180 = vmatpush1.bf16.msra.mxu0 %v1161
  %1181 = vmatprep.subr.bf16.mxu0 0
  %1182 = vmatpush1.bf16.msra.mxu0 %v1160
  %1183 = vmatprep.subr.bf16.mxu0 0
  %1184 = vmatpush1.bf16.msra.mxu0 %v1159
  %1185 = vmatprep.subr.bf16.mxu0 0
  %1186 = vmatpush1.bf16.msra.mxu0 %v1158
  %1187 = vmatprep.subr.bf16.mxu0 0
  %1188 = vmatpush1.bf16.msra.mxu0 %v1157
  %1189 = vmatprep.subr.bf16.mxu0 0
  %1190 = vmatpush2.bf16.msra.mxu0 0
  %1191 = vmatprep.subr.bf16.mxu0 0
  %1192 = vmatpush2.bf16.msra.mxu0 0
  %1193 = vmatprep.subr.bf16.mxu0 0
  %1194 = vmatpush2.bf16.msra.mxu0 0
  %1195 = vmatprep.subr.bf16.mxu0 0
  %1196 = vmatpush2.bf16.msra.mxu0 0
  %1197 = vmatprep.subr.bf16.mxu0 0
  %1198 = vmatpush2.bf16.msra.mxu0 0
  %1199 = vmatprep.subr.bf16.mxu0 0
  %1200 = vmatpush2.bf16.msra.mxu0 0
  %1201 = vmatprep.subr.bf16.mxu0 0
  %1202 = vmatpush2.bf16.msra.mxu0 0
  %1203 = vmatprep.subr.bf16.mxu0 0
  %1204 = vmatpush2.bf16.msra.mxu0 0
  %1205 = vmatprep.mubr.bf16.mxu0 0
  %1206 = vmatmul.mubr.bf16.gmra.mxu0 %v1108
  %v1207 = vpop.f32.mrf.mxu0
  %v1208 = vadd.f32 0.0, %v1207
  %v1209 = vpop.f32.mrf.mxu0
  %v1210 = vpop.f32.mrf.mxu0
  %v1211 = vpop.f32.mrf.mxu0
  %1212 = vdwg.mxu0
  %v1213 = vadd.f32 %v1107, %v1208
  %v1214 = vmul.f32 %v226, %v1094
  %v1215 = vsub.f32 %v1213, %v1214
  %v1216 = vmul.f32 %v219, %v1096
  %v1217 = vsub.f32 %v1215, %v1216
  %v1218 = vmul.f32 %v1217, 0.01
  %v1219 = vadd.f32 %v1094, %v1218
  %v1220 = vmul.f32 %v1219, 0.01
  %v1221 = vadd.f32 %v1096, %v1220
  %v1222 = vadd.f32 %v1102, 1.0
  %vm1223 = vcmp.gt.f32.partialorder %v1221, %v1222
  %v1224 = vsel %vm1223, 1, 0
  %v1225 = vcvt.s32.f32 %v1224
  %v1226 = vmul.f32 %v1102, 0.9
  %v1227 = vadd.f32 %v1226, %v1225
  %s1228 = scalar_lea.vmem [#allocation3], 56
  %1229 = vst [vmem:[%s1228] sm:$0xff] %v1225
  %v1230 = vadd.f32 %v1105, %v1225
  %1231 = vst [vmem:[#allocation5] sm:$0xff] %v1221
  %1232 = vst [vmem:[#allocation6] sm:$0xff] %v1219
  %1233 = vst [vmem:[#allocation7] sm:$0xff] %v1227
  %1234 = vst [vmem:[#allocation8] sm:$0xff] %v1225
  %1235 = vst [vmem:[#allocation10] sm:$0xff] %v1230
  %v1236 = vld [vmem:[#allocation3] sm:$0xff]
  %v1237 = vld [vmem:[#allocation3 + $0x8] sm:$0xff]
  %v1238 = vld [vmem:[#allocation3 + $0x10] sm:$0xff]
  %v1239 = vld [vmem:[#allocation3 + $0x18] sm:$0xff]
  %v1240 = vld [vmem:[#allocation3 + $0x20] sm:$0xff]
  %v1241 = vld [vmem:[#allocation3 + $0x28] sm:$0xff]
  %v1242 = vld [vmem:[#allocation3 + $0x30] sm:$0xff]
  %v1243 = vld [vmem:[#allocation3 + $0x38] sm:$0xff]
  %v1244 = vpack.c.bf16 %v1237, %v1236
  %v1245 = vpack.c.bf16 %v1239, %v1238
  %v1246 = vpack.c.bf16 %v1241, %v1240
  %v1247 = vpack.c.bf16 %v1243, %v1242
  %v1248 = vld [vmem:[%s3] sm:$0xf]
  %v1249 = vld [vmem:[%s3 + $0x4] sm:$0xf]
  %v1250 = vld [vmem:[%s3 + $0x8] sm:$0xf]
  %v1251 = vld [vmem:[%s3 + $0xc] sm:$0xf]
  %v1252 = vld [vmem:[%s3 + $0x10] sm:$0xf]
  %v1253 = vld [vmem:[%s3 + $0x14] sm:$0xf]
  %v1254 = vld [vmem:[%s3 + $0x18] sm:$0xf]
  %v1255 = vld [vmem:[%s3 + $0x1c] sm:$0xf]
  %v1256 = vld [vmem:[%s3 + $0x20] sm:$0xf]
  %v1257 = vld [vmem:[%s3 + $0x24] sm:$0xf]
  %v1258 = vld [vmem:[%s3 + $0x28] sm:$0xf]
  %v1259 = vld [vmem:[%s3 + $0x2c] sm:$0xf]
  %v1260 = vld [vmem:[%s3 + $0x30] sm:$0xf]
  %v1261 = vld [vmem:[%s3 + $0x34] sm:$0xf]
  %v1262 = vld [vmem:[%s3 + $0x38] sm:$0xf]
  %v1263 = vld [vmem:[%s3 + $0x3c] sm:$0xf]
  %v1280 = vunpack.c.l.b16 %v1248
  %v1281 = vunpack.c.l.b16 %v1249
  %v1282 = vunpack.c.l.b16 %v1250
  %v1283 = vunpack.c.l.b16 %v1251
  %v1284 = vunpack.c.l.b16 %v1252
  %v1285 = vunpack.c.l.b16 %v1253
  %v1286 = vunpack.c.l.b16 %v1254
  %v1287 = vunpack.c.l.b16 %v1255
  %v1288 = vunpack.c.l.b16 %v1256
  %v1289 = vunpack.c.l.b16 %v1257
  %v1290 = vunpack.c.l.b16 %v1258
  %v1291 = vunpack.c.l.b16 %v1259
  %v1292 = vunpack.c.l.b16 %v1260
  %v1293 = vunpack.c.l.b16 %v1261
  %v1294 = vunpack.c.l.b16 %v1262
  %v1295 = vunpack.c.l.b16 %v1263
  %v1296 = vpack.c.b16 %v1281, %v1280
  %v1297 = vpack.c.b16 %v1283, %v1282
  %v1298 = vpack.c.b16 %v1285, %v1284
  %v1299 = vpack.c.b16 %v1287, %v1286
  %v1300 = vpack.c.b16 %v1289, %v1288
  %v1301 = vpack.c.b16 %v1291, %v1290
  %v1302 = vpack.c.b16 %v1293, %v1292
  %v1303 = vpack.c.b16 %v1295, %v1294
  %1312 = vmatprep.subr.bf16.mxu0 0
  %1313 = vmatpush1.bf16.msra.mxu0 %v1303
  %1314 = vmatprep.subr.bf16.mxu0 0
  %1315 = vmatpush1.bf16.msra.mxu0 %v1302
  %1316 = vmatprep.subr.bf16.mxu0 0
  %1317 = vmatpush1.bf16.msra.mxu0 %v1301
  %1318 = vmatprep.subr.bf16.mxu0 0
  %1319 = vmatpush1.bf16.msra.mxu0 %v1300
  %1320 = vmatprep.subr.bf16.mxu0 0
  %1321 = vmatpush1.bf16.msra.mxu0 %v1299
  %1322 = vmatprep.subr.bf16.mxu0 0
  %1323 = vmatpush1.bf16.msra.mxu0 %v1298
  %1324 = vmatprep.subr.bf16.mxu0 0
  %1325 = vmatpush1.bf16.msra.mxu0 %v1297
  %1326 = vmatprep.subr.bf16.mxu0 0
  %1327 = vmatpush1.bf16.msra.mxu0 %v1296
  %1328 = vmatprep.subr.bf16.mxu0 0
  %1329 = vmatpush2.bf16.msra.mxu0 0
  %1330 = vmatprep.subr.bf16.mxu0 0
  %1331 = vmatpush2.bf16.msra.mxu0 0
  %1332 = vmatprep.subr.bf16.mxu0 0
  %1333 = vmatpush2.bf16.msra.mxu0 0
  %1334 = vmatprep.subr.bf16.mxu0 0
  %1335 = vmatpush2.bf16.msra.mxu0 0
  %1336 = vmatprep.subr.bf16.mxu0 0
  %1337 = vmatpush2.bf16.msra.mxu0 0
  %1338 = vmatprep.subr.bf16.mxu0 0
  %1339 = vmatpush2.bf16.msra.mxu0 0
  %1340 = vmatprep.subr.bf16.mxu0 0
  %1341 = vmatpush2.bf16.msra.mxu0 0
  %1342 = vmatprep.subr.bf16.mxu0 0
  %1343 = vmatpush2.bf16.msra.mxu0 0
  %1344 = vmatprep.mubr.bf16.mxu0 0
  %1345 = vmatmul.mubr.bf16.gmra.mxu0 %v1244
  %v1346 = vpop.f32.mrf.mxu0
  %v1347 = vadd.f32 0.0, %v1346
  %v1348 = vpop.f32.mrf.mxu0
  %v1349 = vpop.f32.mrf.mxu0
  %v1350 = vadd.f32 0.0, %v1349
  %v1351 = vpop.f32.mrf.mxu0
  %1352 = vmatprep.mubr.bf16.mxu0 0
  %1353 = vmatmul.mubr.bf16.gmra.mxu0 %v1245
  %v1354 = vpop.f32.mrf.mxu0
  %v1355 = vadd.f32 0.0, %v1354
  %v1356 = vpop.f32.mrf.mxu0
  %v1357 = vpop.f32.mrf.mxu0
  %v1358 = vadd.f32 0.0, %v1357
  %v1359 = vpop.f32.mrf.mxu0
  %1360 = vmatprep.mubr.bf16.mxu0 0
  %1361 = vmatmul.mubr.bf16.gmra.mxu0 %v1246
  %v1362 = vpop.f32.mrf.mxu0
  %v1363 = vadd.f32 0.0, %v1362
  %v1364 = vpop.f32.mrf.mxu0
  %v1365 = vpop.f32.mrf.mxu0
  %v1366 = vadd.f32 0.0, %v1365
  %v1367 = vpop.f32.mrf.mxu0
  %1368 = vmatprep.mubr.bf16.mxu0 0
  %1369 = vmatmul.mubr.bf16.gmra.mxu0 %v1247
  %v1370 = vpop.f32.mrf.mxu0
  %v1371 = vadd.f32 0.0, %v1370
  %v1372 = vpop.f32.mrf.mxu0
  %v1373 = vpop.f32.mrf.mxu0
  %v1374 = vadd.f32 0.0, %v1373
  %v1375 = vpop.f32.mrf.mxu0
  %1376 = vdwg.mxu0
  %1377 = vst [vmem:[#allocation4] sm:$0xff] %v1347
  %1378 = vst [vmem:[#allocation4 + $0x8] sm:$0xff] %v1350
  %1379 = vst [vmem:[#allocation4 + $0x10] sm:$0xff] %v1355
  %1380 = vst [vmem:[#allocation4 + $0x18] sm:$0xff] %v1358
  %1381 = vst [vmem:[#allocation4 + $0x20] sm:$0xff] %v1363
  %1382 = vst [vmem:[#allocation4 + $0x28] sm:$0xff] %v1366
  %1383 = vst [vmem:[#allocation4 + $0x30] sm:$0xff] %v1371
  %1384 = vst [vmem:[#allocation4 + $0x38] sm:$0xff] %v1374
  %v1385 = vld [vmem:[%s6] sm:$0x1]
  %v1387 = vlaneseq
  %v1388 = vshrl.u32 %v1387, 7
  %v1389 = vsub.s32 0, %v1388
  %v1390 = vrot.slane %v1385, %v1389
  %v1392 = vld [vmem:[%s7] sm:$0x1]
  %v1394 = vlaneseq
  %v1395 = vshrl.u32 %v1394, 7
  %v1396 = vsub.s32 0, %v1395
  %v1397 = vrot.slane %v1392, %v1396
  %v1399 = vld [vmem:[#allocation9] sm:$0xff]
  %v1400 = vmul.f32 %v1390, %v1399
  %v1401 = vld [vmem:[#allocation4] sm:$0xff]
  %v1402 = vmul.f32 %v1397, %v1401
  %v1403 = vadd.f32 %v1400, %v1402
  %1404 = vst [vmem:[%s8] sm:$0xff] %v1403
  %v1405 = vmul.f32 %v1390, %v1403
  %s1406 = scalar_lea.vmem [#allocation4], 8
  %v1407 = vld [vmem:[%s1406] sm:$0xff]
  %v1408 = vmul.f32 %v1397, %v1407
  %v1409 = vadd.f32 %v1405, %v1408
  %s1410 = scalar_lea.vmem %s8, 8
  %1411 = vst [vmem:[%s1410] sm:$0xff] %v1409
  %v1412 = vmul.f32 %v1390, %v1409
  %s1413 = scalar_lea.vmem [#allocation4], 16
  %v1414 = vld [vmem:[%s1413] sm:$0xff]
  %v1415 = vmul.f32 %v1397, %v1414
  %v1416 = vadd.f32 %v1412, %v1415
  %s1417 = scalar_lea.vmem %s8, 16
  %1418 = vst [vmem:[%s1417] sm:$0xff] %v1416
  %v1419 = vmul.f32 %v1390, %v1416
  %s1420 = scalar_lea.vmem [#allocation4], 24
  %v1421 = vld [vmem:[%s1420] sm:$0xff]
  %v1422 = vmul.f32 %v1397, %v1421
  %v1423 = vadd.f32 %v1419, %v1422
  %s1424 = scalar_lea.vmem %s8, 24
  %1425 = vst [vmem:[%s1424] sm:$0xff] %v1423
  %v1426 = vmul.f32 %v1390, %v1423
  %s1427 = scalar_lea.vmem [#allocation4], 32
  %v1428 = vld [vmem:[%s1427] sm:$0xff]
  %v1429 = vmul.f32 %v1397, %v1428
  %v1430 = vadd.f32 %v1426, %v1429
  %s1431 = scalar_lea.vmem %s8, 32
  %1432 = vst [vmem:[%s1431] sm:$0xff] %v1430
  %v1433 = vmul.f32 %v1390, %v1430
  %s1434 = scalar_lea.vmem [#allocation4], 40
  %v1435 = vld [vmem:[%s1434] sm:$0xff]
  %v1436 = vmul.f32 %v1397, %v1435
  %v1437 = vadd.f32 %v1433, %v1436
  %s1438 = scalar_lea.vmem %s8, 40
  %1439 = vst [vmem:[%s1438] sm:$0xff] %v1437
  %v1440 = vmul.f32 %v1390, %v1437
  %s1441 = scalar_lea.vmem [#allocation4], 48
  %v1442 = vld [vmem:[%s1441] sm:$0xff]
  %v1443 = vmul.f32 %v1397, %v1442
  %v1444 = vadd.f32 %v1440, %v1443
  %s1445 = scalar_lea.vmem %s8, 48
  %1446 = vst [vmem:[%s1445] sm:$0xff] %v1444
  %v1447 = vmul.f32 %v1390, %v1444
  %s1448 = scalar_lea.vmem [#allocation4], 56
  %v1449 = vld [vmem:[%s1448] sm:$0xff]
  %v1450 = vmul.f32 %v1397, %v1449
  %v1451 = vadd.f32 %v1447, %v1450
  %s1452 = scalar_lea.vmem %s8, 56
  %1453 = vst [vmem:[%s1452] sm:$0xff] %v1451
  %1454 = vst [vmem:[#allocation9] sm:$0xff] %v1451
  // Predicated region
  $region38: #{simple_harmonic_rnn.1} parent=0 // pred_check
    %p1455 = pneg %p35
  $region39: #{simple_harmonic_rnn.1} parent=0 // pred_check_branch
    %1457 = sbr.rel (%p1455) target = $region41
  $region40: #{simple_harmonic_rnn.1} parent=0 // pred_region
    %1458 = vst [vmem:[%s9] sm:$0xff] %v1225
    %1459 = vst [vmem:[%s10] sm:$0xff] %v1221
    %1460 = vst [vmem:[%s11] sm:$0xff] %v1451
    %1461 = vadd.xlane.f32.xlu0 %v1230
    %v1462 = vpop.xlane.xlu0 %1461
    %v1463 = vrot.slane %v1462, 4
    %v1464 = vadd.f32 %v1462, %v1463
    %v1465 = vrot.slane %v1464, 2
    %v1466 = vadd.f32 %v1464, %v1465
    %v1467 = vrot.slane %v1466, 1
    %v1468 = vadd.f32 %v1466, %v1467
    %s1469 = vtos %v1468
    %v1470 = vstv %s1469
    %1471 = vst [vmem:[%s12] sm:$0xff] %v1470
  $region41: #{simple_harmonic_rnn.1} parent=0 // pred_fallthru
    _
  // Predicated region
  $region42: #{simple_harmonic_rnn.1} parent=0 // pred_check
    _
  $region43: #{simple_harmonic_rnn.1} parent=0 // pred_check_branch
    %1473 = sbr.rel (0) target = $region45
  $region44: #{simple_harmonic_rnn.1} parent=0 // pred_region
    _
  $region45: #{simple_harmonic_rnn.1} parent=0 // pred_fallthru
    _
  // Predicated region
  $region46: #{simple_harmonic_rnn.1} parent=0 // pred_check
    _
  $region47: #{simple_harmonic_rnn.1} parent=0 // pred_check_branch
    %1475 = sbr.rel (0) target = $region49
  $region48: #{simple_harmonic_rnn.1} parent=0 // pred_region
    _
  $region49: #{simple_harmonic_rnn.1} parent=0 // pred_fallthru
    _
  // Predicated region
  $region50: #{simple_harmonic_rnn.1} parent=0 // pred_check
    _
  $region51: #{simple_harmonic_rnn.1} parent=0 // pred_check_branch
    %1477 = sbr.rel (0) target = $region53
  $region52: #{simple_harmonic_rnn.1} parent=0 // pred_region
    _
  $region53: #{simple_harmonic_rnn.1} parent=0 // pred_fallthru
    _
  // Predicated region
  $region54: #{simple_harmonic_rnn.1} parent=0 // pred_check
    _
  $region55: #{simple_harmonic_rnn.1} parent=0 // pred_check_branch
    %1479 = sbr.rel (0) target = $region57
  $region56: #{simple_harmonic_rnn.1} parent=0 // pred_region
    _
  $region57: #{simple_harmonic_rnn.1} parent=0 // pred_fallthru
    _
  // Predicated region
  $region58: #{simple_harmonic_rnn.1} parent=0 // pred_check
    _
  $region59: #{simple_harmonic_rnn.1} parent=0 // pred_check_branch
    %1481 = sbr.rel (0) target = $region61
  $region60: #{simple_harmonic_rnn.1} parent=0 // pred_region
    _
  $region61: #{simple_harmonic_rnn.1} parent=0 // pred_fallthru
    _
  // Predicated region
  $region62: #{simple_harmonic_rnn.1} parent=0 // pred_check
    _
  $region63: #{simple_harmonic_rnn.1} parent=0 // pred_check_branch
    %1483 = sbr.rel (0) target = $region65
  $region64: #{simple_harmonic_rnn.1} parent=0 // pred_region
    _
  $region65: #{simple_harmonic_rnn.1} parent=0 // pred_fallthru
    _
  // Predicated region
  $region66: #{simple_harmonic_rnn.1} parent=0 // pred_check
    _
  $region67: #{simple_harmonic_rnn.1} parent=0 // pred_check_branch
    %1485 = sbr.rel (0) target = $region69
  $region68: #{simple_harmonic_rnn.1} parent=0 // pred_region
    _
  $region69: #{simple_harmonic_rnn.1} parent=0 // pred_fallthru
    _
  // Predicated region
  $region70: #{simple_harmonic_rnn.1} parent=0 // pred_check
    _
  $region71: #{simple_harmonic_rnn.1} parent=0 // pred_check_branch
    %1487 = sbr.rel (0) target = $region73
  $region72: #{simple_harmonic_rnn.1} parent=0 // pred_region
    _
  $region73: #{simple_harmonic_rnn.1} parent=0 // pred_fallthru
    _
  // Predicated region
  $region74: #{simple_harmonic_rnn.1} parent=0 // pred_check
    _
  $region75: #{simple_harmonic_rnn.1} parent=0 // pred_check_branch
    %1489 = sbr.rel (0) target = $region77
  $region76: #{simple_harmonic_rnn.1} parent=0 // pred_region
    _
  $region77: #{simple_harmonic_rnn.1} parent=0 // pred_fallthru
    _
  // Predicated region
  $region78: #{simple_harmonic_rnn.1} parent=0 // pred_check
    _
  $region79: #{simple_harmonic_rnn.1} parent=0 // pred_check_branch
    %1491 = sbr.rel (0) target = $region81
  $region80: #{simple_harmonic_rnn.1} parent=0 // pred_region
    _
  $region81: #{simple_harmonic_rnn.1} parent=0 // pred_fallthru
    _

</llo_original>
